<compile_context>
chip_gen: v5e
topology: v5e:2x2
jax: 0.10.0
libtpu: 0.0.40
codegen_flags: <defaults>
</compile_context>

<pallas_src>
import jax
import jax.numpy as jnp
from jax.experimental import pallas as pl
from jax.experimental.pallas import tpu as pltpu

# ----- synthetic MANO model sizes (vertex count rounded to a TPU-friendly 768) ---
V = 768            # MANO has 778 verts; synthetic model uses 768 (multiple of 128)
J = 16             # kinematic joints (wrist + 15)
NPOSE = 135        # 15 joints * 9 (rotation - identity), pose-corrective basis
NPOSE_PAD = 144    # padded to a multiple of 8 for clean sublane tiling / MXU feed
NBETAS = 10
NFACES = 1536
NJOINTS_OUT = 21   # 16 kinematic joints + 5 fingertips


# =========================== Pallas kernel ===========================

def _make_fused_mano_kernel(n, v, use_scratch):
    """Fused pose-corrective blendshapes + batched linear blend skinning.

    Ref layout (all lane-dense, vertex on lanes):
      pm_ref : (N, 144)     bf16  pose map (rot - I), rows zero-padded 135..143
      pd_ref : (144, 3*V)   bf16  posedirs, column index = d*V + v
      gt_ref : (N*16, 16)   f32   stacked transposed per-joint 4x4s:
                                  gt[b*16 + 4*j + i, joint] = G[b, joint, i, j]
      wt_ref : (16, V)      f32   skinning weights transposed (joint, vertex)
      vsh_ref: (3, V)       f32   shape-blended rest template, transposed (coord, vertex)
      o_ref  : (N*3, V)     f32   skinned xyz rows
      scr[0] : (N*16, V)    f32   optional VMEM scratch (only when N >= 8)
    """
    def kernel(pm_ref, pd_ref, gt_ref, wt_ref, vsh_ref, o_ref, *scr):
        # --- A: pose-corrective blendshape offsets (bf16 x bf16 MXU, f32 accumulate) ---
        # NOTE(v7x): posedirs could be fed as fp8 (e4m3, per-row scale folded into the
        # f32 accumulation) to halve this dominant HBM load; keep bf16 on v5e/v6e.
        offs = jnp.dot(pm_ref[...], pd_ref[...],
                       preferred_element_type=jnp.float32)              # (N, 3V)

        # --- B1: per-vertex transform rows for ALL batches in one f32 MXU call ---
        # t[b*16 + 4*j + i, vtx] = T_{b,vtx}[i, j] = sum_joint w[vtx,joint]*G[b,joint,i,j]
        t_all = jnp.dot(gt_ref[...], wt_ref[...],
                        preferred_element_type=jnp.float32)             # (N*16, V)
        if use_scratch:
            scr[0][...] = t_all          # bound vreg pressure for large N
            t_src = scr[0]
        else:
            t_src = t_all                # small N: stays in vregs, no vst/vld round-trip

        # --- B2: homogeneous apply on lane-dense (3, V) slabs, one store per batch ---
        vsh = vsh_ref[...]                                               # (3, V)
        for b in range(n):                                               # static, small N
            off_b = offs[b:b + 1, :]                                     # (1, 3V)
            vx = vsh[0:1, :] + off_b[:, 0:v]                             # (1, V)
            vy = vsh[1:2, :] + off_b[:, v:2 * v]
            vz = vsh[2:3, :] + off_b[:, 2 * v:3 * v]
            base = b * J
            # out[i, :] = sum_j T[i, j] * vh[j, :]   (vh[3] == 1 -> translation added)
            acc = (t_src[base + 0:base + 3, :] * vx +
                   t_src[base + 4:base + 7, :] * vy +
                   t_src[base + 8:base + 11, :] * vz +
                   t_src[base + 12:base + 15, :])                        # (3, V)
            # direct lane-dense unmasked store; live range bounded to this batch
            o_ref[b * 3:(b + 1) * 3, :] = acc

    return kernel


def fused_mano_skin(pose_map_pad, posedirs_pad, gt_stacked, weights_t, vsh_t):
    n = pose_map_pad.shape[0]
    v = weights_t.shape[1]
    use_scratch = n >= 8            # below this the (N*16, V) result fits the vreg file
    kernel = _make_fused_mano_kernel(n, v, use_scratch)
    scratch_shapes = [pltpu.VMEM((n * J, v), jnp.float32)] if use_scratch else []
    # NOTE(v7x): with 2 TensorCores per chip, a "parallel" batch grid axis (posedirs
    # index_map held constant so it stays VMEM-resident) would shard batches across
    # both cores; grid=(1,) keeps per-step overhead minimal on 1-TC v5e/v6e.
    # NOTE(v5e): the ~650 KiB posedirs DMA is fully exposed with grid=(1,); chunking
    # the 3V columns into a short reduction axis would overlap it with compute there.
    return pl.pallas_call(
        kernel,
        out_shape=jax.ShapeDtypeStruct((n * 3, v), jnp.float32),
        grid=(1,),
        in_specs=[pl.BlockSpec((n, NPOSE_PAD), lambda i: (0, 0)),
                  pl.BlockSpec((NPOSE_PAD, 3 * v), lambda i: (0, 0)),
                  pl.BlockSpec((n * J, J), lambda i: (0, 0)),
                  pl.BlockSpec((J, v), lambda i: (0, 0)),
                  pl.BlockSpec((3, v), lambda i: (0, 0))],
        out_specs=pl.BlockSpec((n * 3, v), lambda i: (0, 0)),
        scratch_shapes=scratch_shapes,
    )(pose_map_pad, posedirs_pad, gt_stacked, weights_t, vsh_t)


# =========================== JAX glue ===========================

def axis_angle_to_matrix(aa):
    """Rodrigues. aa: (..., 3) -> (..., 3, 3)."""
    angle = jnp.linalg.norm(aa, axis=-1, keepdims=True) + 1e-8
    axis = aa / angle
    x, y, z = axis[..., 0], axis[..., 1], axis[..., 2]
    a = angle[..., 0]
    ca, sa = jnp.cos(a), jnp.sin(a)
    c = 1.0 - ca
    r = jnp.stack([
        ca + x * x * c, x * y * c - z * sa, x * z * c + y * sa,
        y * x * c + z * sa, ca + y * y * c, y * z * c - x * sa,
        z * x * c - y * sa, z * y * c + x * sa, ca + z * z * c,
    ], axis=-1)
    return r.reshape(aa.shape[:-1] + (3, 3))


def _with_zeros(rt):
    """(..., 3, 4) -> (..., 4, 4) appending [0, 0, 0, 1]."""
    pad = jnp.broadcast_to(jnp.array([0.0, 0.0, 0.0, 1.0], jnp.float32),
                           rt.shape[:-2] + (1, 4))
    return jnp.concatenate([rt, pad], axis=-2)


class ManopthWrapperJax:
    """JAX/Pallas port of ManopthWrapper.forward (mode='outer', texture='verts',
    return_mesh=False semantics: returns (verts, faces, textures, joints))."""

    def __init__(self, key, metric=1.0):
        ks = jax.random.split(key, 8)
        self.metric = metric
        # Deterministic synthetic MANO parameters (shapes match the real model,
        # vertex count rounded to 768).
        self.v_template = jax.random.normal(ks[0], (V, 3), jnp.float32) * 0.01
        self.shapedirs = jax.random.normal(ks[1], (V, 3, NBETAS), jnp.float32) * 0.01
        posedirs = jax.random.normal(ks[2], (V, 3, NPOSE), jnp.float32) * 0.001
        # kernel layout: (144, 3*V), row = pose component (zero-padded), col = d*V + v
        pd = jnp.transpose(posedirs, (2, 1, 0)).reshape(NPOSE, 3 * V)
        self.posedirs_pad = (jnp.zeros((NPOSE_PAD, 3 * V), jnp.float32)
                             .at[:NPOSE, :].set(pd)).astype(jnp.bfloat16)
        jr = jax.random.uniform(ks[3], (J, V), jnp.float32)
        self.J_regressor = jr / jnp.sum(jr, axis=1, keepdims=True)
        w = jax.random.uniform(ks[4], (V, J), jnp.float32)
        w = w / jnp.sum(w, axis=1, keepdims=True)
        # f32 skin weights (48 KiB): exact per-vertex sums, no in-kernel upcast needed.
        self.weights_t = jnp.transpose(w)                               # (J, V) f32
        self.betas = jax.random.normal(ks[5], (NBETAS,), jnp.float32) * 0.1
        self.hand_faces = jax.random.randint(ks[6], (NFACES, 3), 0, V, dtype=jnp.int32)
        # flat_hand_mean=True -> the layer adds no mean; buffer kept for parity.
        self.hand_mean = jnp.zeros((1, 45), jnp.float32)
        self.t_mano = jnp.array([[0.09566994, 0.00638343, 0.0061863]], jnp.float32)
        self.tip_idx = jnp.array([745, 317, 444, 556, 673], jnp.int32)

        # --- batch-invariant, betas-fixed precomputation (hoisted out of forward) ---
        self.v_shaped = self.v_template + jnp.einsum('vdk,k->vd',
                                                     self.shapedirs, self.betas)  # (V,3)
        self.th_j_base = self.J_regressor @ self.v_shaped                          # (16,3)
        self.vsh_t = jnp.transpose(self.v_shaped)                                  # (3,V)

        self._forward_layer_jit = jax.jit(self._forward_layer)

    # ----- kinematic chain exactly as in pose_to_transform / manopth -----
    def _kinematic_chain(self, rots, th_j):
        n = rots.shape[0]
        root_rot = rots[:, 0]                               # (N,3,3)
        all_rots = rots[:, 1:]                              # (N,15,3,3)
        root_j = th_j[:, 0].reshape(n, 3, 1)
        root_trans = _with_zeros(jnp.concatenate([root_rot, root_j], axis=2))
        lev1_idxs = [1, 4, 7, 10, 13]
        lev2_idxs = [2, 5, 8, 11, 14]
        lev3_idxs = [3, 6, 9, 12, 15]
        lev1_rots = all_rots[:, [i - 1 for i in lev1_idxs]]
        lev2_rots = all_rots[:, [i - 1 for i in lev2_idxs]]
        lev3_rots = all_rots[:, [i - 1 for i in lev3_idxs]]
        lev1_j = th_j[:, jnp.array(lev1_idxs)]
        lev2_j = th_j[:, jnp.array(lev2_idxs)]
        lev3_j = th_j[:, jnp.array(lev3_idxs)]

        lev1_rel = _with_zeros(jnp.concatenate(
            [lev1_rots, (lev1_j - th_j[:, 0:1])[..., None]], axis=-1))
        lev1 = jnp.einsum('nij,nkjl->nkil', root_trans, lev1_rel)
        lev2_rel = _with_zeros(jnp.concatenate(
            [lev2_rots, (lev2_j - lev1_j)[..., None]], axis=-1))
        lev2 = jnp.einsum('nkij,nkjl->nkil', lev1, lev2_rel)
        lev3_rel = _with_zeros(jnp.concatenate(
            [lev3_rots, (lev3_j - lev2_j)[..., None]], axis=-1))
        lev3 = jnp.einsum('nkij,nkjl->nkil', lev2, lev3_rel)

        all_t = jnp.concatenate([root_trans[:, None], lev1, lev2, lev3], axis=1)
        reorder = jnp.array([0, 1, 6, 11, 2, 7, 12, 3, 8, 13, 4, 9, 14, 5, 10, 15])
        return all_t[:, reorder]                            # (N,16,4,4)

    def _forward_layer(self, pose, trans, glb_se3):
        """pose: (N, 48) axis-angle, trans: (N, 3), glb_se3: (N, 4, 4)."""
        n = pose.shape[0]
        rots = axis_angle_to_matrix(pose.reshape(n, J, 3))             # (N,16,3,3)
        pose_map = (rots[:, 1:] - jnp.eye(3, dtype=jnp.float32)).reshape(n, NPOSE)
        pose_map_pad = (jnp.zeros((n, NPOSE_PAD), jnp.float32)
                        .at[:, :NPOSE].set(pose_map)).astype(jnp.bfloat16)

        # joint regression result (precomputed in __init__, betas are fixed)
        th_j = jnp.broadcast_to(self.th_j_base, (n, J, 3))              # (N,16,3)

        # global joint transforms + remove rest-pose joint locations
        a_global = self._kinematic_chain(rots, th_j)                    # (N,16,4,4)
        jh0 = jnp.concatenate([th_j, jnp.zeros((n, J, 1), jnp.float32)], axis=-1)
        rel = jnp.einsum('njab,njb->nja', a_global, jh0)                # (N,16,4)
        a2 = a_global - jnp.concatenate(
            [jnp.zeros((n, J, 4, 3), jnp.float32), rel[..., None]], axis=-1)

        # fold (+trans, /1000*metric, glb_se3) into the per-joint transforms
        scale = self.metric / 1000.0
        st = (jnp.zeros((n, 4, 4), jnp.float32)
              .at[:, 0, 0].set(scale).at[:, 1, 1].set(scale)
              .at[:, 2, 2].set(scale).at[:, 3, 3].set(1.0)
              .at[:, :3, 3].set(trans * scale))
        mt = jnp.einsum('nij,njk->nik', glb_se3, st)                    # (N,4,4)
        g = jnp.einsum('nij,nkjl->nkil', mt, a2)                        # (N,16,4,4)
        # transposed + stacked for the fused kernel:
        #   gt[b*16 + 4*j + i, joint] = G[b, joint, i, j]
        gt_stacked = jnp.transpose(g, (0, 3, 2, 1)).reshape(n * J, J)   # (N*16,16) f32

        # --- fused Pallas kernel: pose blend + batched LBS, vertex-on-lanes ---
        out = fused_mano_skin(pose_map_pad, self.posedirs_pad,
                              gt_stacked, self.weights_t, self.vsh_t)   # (N*3, V)
        verts = jnp.transpose(out.reshape(n, 3, V), (0, 2, 1))          # (N, V, 3)

        # joints: 16 kinematic joints + 5 fingertip vertices, MANO ordering
        j16 = a_global[..., :3, 3]                                      # (N,16,3)
        j16h = jnp.concatenate([j16, jnp.ones((n, J, 1), jnp.float32)], axis=-1)
        j16_cam = jnp.einsum('nij,nkj->nki', mt, j16h)[..., :3]
        tips_cam = verts[:, self.tip_idx]                               # (N,5,3)
        joints = jnp.concatenate([j16_cam, tips_cam], axis=1)
        reorder = jnp.array([0, 13, 14, 15, 16, 1, 2, 3, 17, 4, 5, 6, 18,
                             10, 11, 12, 19, 7, 8, 9, 20])
        joints = joints[:, reorder]                                     # (N,21,3)

        faces = jnp.broadcast_to(self.hand_faces[None], (n, NFACES, 3))
        return verts, joints, faces

    def __call__(self, glb_se3, art_pose, axisang=None, trans=None):
        """mode='outer', texture='verts', return_mesh=False path."""
        n = art_pose.shape[0]
        if axisang is None:
            axisang = jnp.zeros((n, 3), jnp.float32)
        if trans is None:
            trans = jnp.zeros((n, 3), jnp.float32)
        if art_pose.shape[-1] == 45:
            art_pose = jnp.concatenate([axisang, art_pose], axis=-1)
        if glb_se3 is None:
            glb_se3 = jnp.broadcast_to(jnp.eye(4, dtype=jnp.float32), (n, 4, 4))
        verts, joints, faces = self._forward_layer_jit(art_pose, trans, glb_se3)
        # TODO(synk): pytorch3d Meshes / TexturesVertex wrappers have no Pallas/JAX
        # equivalent; return the raw (verts, faces, textures, joints) tuple instead.
        textures = jnp.ones_like(verts)
        return verts, faces, textures, joints


if __name__ == "__main__":
    key = jax.random.PRNGKey(0)
    k_model, k_pose, k_rot = jax.random.split(key, 3)

    wrapper = ManopthWrapperJax(k_model)

    N = 2
    art_pose = jax.random.normal(k_pose, (N, 45), jnp.float32) * 0.1   # articulated pose
    # global SE3 (N, 4, 4)
    aa = jax.random.normal(k_rot, (N, 3), jnp.float32) * 0.2
    rot = axis_angle_to_matrix(aa)
    t = jnp.array([[0.0, 0.0, 0.3], [0.05, -0.02, 0.4]], jnp.float32)
    glb_se3 = (jnp.zeros((N, 4, 4), jnp.float32)
               .at[:, :3, :3].set(rot).at[:, :3, 3].set(t).at[:, 3, 3].set(1.0))

    verts, faces, textures, joints = wrapper(glb_se3, art_pose)
    jax.block_until_ready((verts, faces, textures, joints))

    assert verts.shape == (N, V, 3) and verts.dtype == jnp.float32
    assert joints.shape == (N, NJOINTS_OUT, 3)
    assert faces.shape == (N, NFACES, 3)
    assert textures.shape == verts.shape
    assert bool(jnp.all(jnp.isfinite(verts))) and bool(jnp.all(jnp.isfinite(joints)))
    print("KERNEL_OK")
</pallas_src>

<mosaic_0001>
module attributes {stable_mosaic.version = 11 : i64} {
  func.func @kernel(%arg0: i32, %arg1: memref<2x144xbf16, #tpu.memory_space<vmem>>, %arg2: memref<144x2304xbf16, #tpu.memory_space<vmem>>, %arg3: memref<32x16xf32, #tpu.memory_space<vmem>>, %arg4: memref<16x768xf32, #tpu.memory_space<vmem>>, %arg5: memref<3x768xf32, #tpu.memory_space<vmem>>, %arg6: memref<6x768xf32, #tpu.memory_space<vmem>>) attributes {dimension_semantics = [#tpu.dimension_semantics<arbitrary>], iteration_bounds = array<i64: 1>, scalar_prefetch = 0 : i64, scratch_operands = 0 : i64, tpu.core_type = #tpu.core_type<tc>, window_params = [{pipeline_mode = #tpu.pipeline_mode<synchronous>, transform_indices = @transform_0, window_bounds = array<i64: 2, 144>}, {pipeline_mode = #tpu.pipeline_mode<synchronous>, transform_indices = @transform_1, window_bounds = array<i64: 144, 2304>}, {pipeline_mode = #tpu.pipeline_mode<synchronous>, transform_indices = @transform_2, window_bounds = array<i64: 32, 16>}, {pipeline_mode = #tpu.pipeline_mode<synchronous>, transform_indices = @transform_3, window_bounds = array<i64: 16, 768>}, {pipeline_mode = #tpu.pipeline_mode<synchronous>, transform_indices = @transform_4, window_bounds = array<i64: 3, 768>}, {pipeline_mode = #tpu.pipeline_mode<synchronous>, transform_indices = @transform_5, window_bounds = array<i64: 6, 768>}]} {
    %c0 = arith.constant 0 : index
    %c0_0 = arith.constant 0 : index
    %0 = vector.load %arg1[%c0, %c0_0] : memref<2x144xbf16, #tpu.memory_space<vmem>>, vector<2x144xbf16>
    %c0_1 = arith.constant 0 : index
    %c0_2 = arith.constant 0 : index
    %1 = vector.load %arg2[%c0_1, %c0_2] : memref<144x2304xbf16, #tpu.memory_space<vmem>>, vector<144x2304xbf16>
    %cst = arith.constant dense<0.000000e+00> : vector<2x2304xf32>
    %2 = tpu.matmul %0, %1, %cst {dimension_numbers = #tpu.dot_dimension_numbers<[1], [0], [0], [1], [0, 0, 1, 1], [], []>} : vector<2x144xbf16>, vector<144x2304xbf16>, vector<2x2304xf32> -> vector<2x2304xf32>
    %c0_3 = arith.constant 0 : index
    %c0_4 = arith.constant 0 : index
    %3 = vector.load %arg3[%c0_3, %c0_4] : memref<32x16xf32, #tpu.memory_space<vmem>>, vector<32x16xf32>
    %c0_5 = arith.constant 0 : index
    %c0_6 = arith.constant 0 : index
    %4 = vector.load %arg4[%c0_5, %c0_6] : memref<16x768xf32, #tpu.memory_space<vmem>>, vector<16x768xf32>
    %cst_7 = arith.constant dense<0.000000e+00> : vector<32x768xf32>
    %5 = tpu.matmul %3, %4, %cst_7 {dimension_numbers = #tpu.dot_dimension_numbers<[1], [0], [0], [1], [0, 0, 1, 1], [], []>} : vector<32x16xf32>, vector<16x768xf32>, vector<32x768xf32> -> vector<32x768xf32>
    %c0_8 = arith.constant 0 : index
    %c0_9 = arith.constant 0 : index
    %6 = vector.load %arg5[%c0_8, %c0_9] : memref<3x768xf32, #tpu.memory_space<vmem>>, vector<3x768xf32>
    %7 = vector.extract_strided_slice %2 {offsets = [0, 0], sizes = [1, 2304], strides = [1, 1]} : vector<2x2304xf32> to vector<1x2304xf32>
    %8 = vector.extract_strided_slice %6 {offsets = [0, 0], sizes = [1, 768], strides = [1, 1]} : vector<3x768xf32> to vector<1x768xf32>
    %9 = vector.extract_strided_slice %7 {offsets = [0, 0], sizes = [1, 768], strides = [1, 1]} : vector<1x2304xf32> to vector<1x768xf32>
    %10 = arith.addf %8, %9 : vector<1x768xf32>
    %11 = vector.extract_strided_slice %6 {offsets = [1, 0], sizes = [1, 768], strides = [1, 1]} : vector<3x768xf32> to vector<1x768xf32>
    %12 = vector.extract_strided_slice %7 {offsets = [0, 768], sizes = [1, 768], strides = [1, 1]} : vector<1x2304xf32> to vector<1x768xf32>
    %13 = arith.addf %11, %12 : vector<1x768xf32>
    %14 = vector.extract_strided_slice %6 {offsets = [2, 0], sizes = [1, 768], strides = [1, 1]} : vector<3x768xf32> to vector<1x768xf32>
    %15 = vector.extract_strided_slice %7 {offsets = [0, 1536], sizes = [1, 768], strides = [1, 1]} : vector<1x2304xf32> to vector<1x768xf32>
    %16 = arith.addf %14, %15 : vector<1x768xf32>
    %17 = vector.extract_strided_slice %5 {offsets = [0, 0], sizes = [3, 768], strides = [1, 1]} : vector<32x768xf32> to vector<3x768xf32>
    %18 = vector.broadcast %10 : vector<1x768xf32> to vector<3x768xf32>
    %19 = arith.mulf %17, %18 : vector<3x768xf32>
    %20 = vector.extract_strided_slice %5 {offsets = [4, 0], sizes = [3, 768], strides = [1, 1]} : vector<32x768xf32> to vector<3x768xf32>
    %21 = vector.broadcast %13 : vector<1x768xf32> to vector<3x768xf32>
    %22 = arith.mulf %20, %21 : vector<3x768xf32>
    %23 = arith.addf %19, %22 : vector<3x768xf32>
    %24 = vector.extract_strided_slice %5 {offsets = [8, 0], sizes = [3, 768], strides = [1, 1]} : vector<32x768xf32> to vector<3x768xf32>
    %25 = vector.broadcast %16 : vector<1x768xf32> to vector<3x768xf32>
    %26 = arith.mulf %24, %25 : vector<3x768xf32>
    %27 = arith.addf %23, %26 : vector<3x768xf32>
    %28 = vector.extract_strided_slice %5 {offsets = [12, 0], sizes = [3, 768], strides = [1, 1]} : vector<32x768xf32> to vector<3x768xf32>
    %29 = arith.addf %27, %28 : vector<3x768xf32>
    %c0_10 = arith.constant 0 : index
    %c0_11 = arith.constant 0 : index
    %30 = vector.load %arg6[%c0_10, %c0_11] : memref<6x768xf32, #tpu.memory_space<vmem>>, vector<3x768xf32>
    tpu.vector_store %arg6[%c0_10, %c0_11], %29 {strides = array<i32>} : memref<6x768xf32, #tpu.memory_space<vmem>>, vector<3x768xf32>,
    %31 = vector.extract_strided_slice %2 {offsets = [1, 0], sizes = [1, 2304], strides = [1, 1]} : vector<2x2304xf32> to vector<1x2304xf32>
    %32 = vector.extract_strided_slice %6 {offsets = [0, 0], sizes = [1, 768], strides = [1, 1]} : vector<3x768xf32> to vector<1x768xf32>
    %33 = vector.extract_strided_slice %31 {offsets = [0, 0], sizes = [1, 768], strides = [1, 1]} : vector<1x2304xf32> to vector<1x768xf32>
    %34 = arith.addf %32, %33 : vector<1x768xf32>
    %35 = vector.extract_strided_slice %6 {offsets = [1, 0], sizes = [1, 768], strides = [1, 1]} : vector<3x768xf32> to vector<1x768xf32>
    %36 = vector.extract_strided_slice %31 {offsets = [0, 768], sizes = [1, 768], strides = [1, 1]} : vector<1x2304xf32> to vector<1x768xf32>
    %37 = arith.addf %35, %36 : vector<1x768xf32>
    %38 = vector.extract_strided_slice %6 {offsets = [2, 0], sizes = [1, 768], strides = [1, 1]} : vector<3x768xf32> to vector<1x768xf32>
    %39 = vector.extract_strided_slice %31 {offsets = [0, 1536], sizes = [1, 768], strides = [1, 1]} : vector<1x2304xf32> to vector<1x768xf32>
    %40 = arith.addf %38, %39 : vector<1x768xf32>
    %41 = vector.extract_strided_slice %5 {offsets = [16, 0], sizes = [3, 768], strides = [1, 1]} : vector<32x768xf32> to vector<3x768xf32>
    %42 = vector.broadcast %34 : vector<1x768xf32> to vector<3x768xf32>
    %43 = arith.mulf %41, %42 : vector<3x768xf32>
    %44 = vector.extract_strided_slice %5 {offsets = [20, 0], sizes = [3, 768], strides = [1, 1]} : vector<32x768xf32> to vector<3x768xf32>
    %45 = vector.broadcast %37 : vector<1x768xf32> to vector<3x768xf32>
    %46 = arith.mulf %44, %45 : vector<3x768xf32>
    %47 = arith.addf %43, %46 : vector<3x768xf32>
    %48 = vector.extract_strided_slice %5 {offsets = [24, 0], sizes = [3, 768], strides = [1, 1]} : vector<32x768xf32> to vector<3x768xf32>
    %49 = vector.broadcast %40 : vector<1x768xf32> to vector<3x768xf32>
    %50 = arith.mulf %48, %49 : vector<3x768xf32>
    %51 = arith.addf %47, %50 : vector<3x768xf32>
    %52 = vector.extract_strided_slice %5 {offsets = [28, 0], sizes = [3, 768], strides = [1, 1]} : vector<32x768xf32> to vector<3x768xf32>
    %53 = arith.addf %51, %52 : vector<3x768xf32>
    %c3 = arith.constant 3 : index
    %c0_12 = arith.constant 0 : index
    %54 = vector.load %arg6[%c3, %c0_12] : memref<6x768xf32, #tpu.memory_space<vmem>>, vector<3x768xf32>
    tpu.vector_store %arg6[%c3, %c0_12], %53 {strides = array<i32>} : memref<6x768xf32, #tpu.memory_space<vmem>>, vector<3x768xf32>,
    return
  }
  func.func @transform_0(%arg0: i32) -> (i32, i32) {
    %c0_i32 = arith.constant 0 : i32
    %c0_i32_0 = arith.constant 0 : i32
    %c0_i32_1 = arith.constant 0 : i32
    return %c0_i32, %c0_i32_0 : i32, i32
  }
  func.func @transform_1(%arg0: i32) -> (i32, i32) {
    %c0_i32 = arith.constant 0 : i32
    %c0_i32_0 = arith.constant 0 : i32
    %c0_i32_1 = arith.constant 0 : i32
    return %c0_i32, %c0_i32_0 : i32, i32
  }
  func.func @transform_2(%arg0: i32) -> (i32, i32) {
    %c0_i32 = arith.constant 0 : i32
    %c0_i32_0 = arith.constant 0 : i32
    %c0_i32_1 = arith.constant 0 : i32
    return %c0_i32, %c0_i32_0 : i32, i32
  }
  func.func @transform_3(%arg0: i32) -> (i32, i32) {
    %c0_i32 = arith.constant 0 : i32
    %c0_i32_0 = arith.constant 0 : i32
    %c0_i32_1 = arith.constant 0 : i32
    return %c0_i32, %c0_i32_0 : i32, i32
  }
  func.func @transform_4(%arg0: i32) -> (i32, i32) {
    %c0_i32 = arith.constant 0 : i32
    %c0_i32_0 = arith.constant 0 : i32
    %c0_i32_1 = arith.constant 0 : i32
    return %c0_i32, %c0_i32_0 : i32, i32
  }
  func.func @transform_5(%arg0: i32) -> (i32, i32) {
    %c0_i32 = arith.constant 0 : i32
    %c0_i32_0 = arith.constant 0 : i32
    %c0_i32_1 = arith.constant 0 : i32
    return %c0_i32, %c0_i32_0 : i32, i32
  }
}

</mosaic_0001>

<llo_original>
// kernel: _forward_layer.1
$region0: #{_forward_layer.1}
  #allocation0 [shape = 'u32[]', space=smem, size = 0x4, offset = 0x4, fixed_abs, tag = 'smem constant byte address 0x4 - core index']
  #allocation1 [shape = 'u32[72,128]{1,0:T(1,128)}', space=vmem, size = 0x9000, scoped, tag = 'internal scratch']
  %s0 = inlined_call_operand.vmem [shape: bf16[2,144], index: 0, kind: input, shape index: {}]
  %s1 = inlined_call_operand.vmem [shape: bf16[144,2304], index: 1, kind: input, shape index: {}]
  %s2 = inlined_call_operand.vmem [shape: f32[32,16], index: 2, kind: input, shape index: {}]
  %s3 = inlined_call_operand.vmem [shape: f32[16,768], index: 3, kind: input, shape index: {}]
  %s4 = inlined_call_operand.vmem [shape: f32[3,768], index: 4, kind: input, shape index: {}]
  %s5 = inlined_call_operand.vmem [shape: f32[6,768], index: 5, kind: output, shape index: {}]
  %s6 = sld [smem:[#allocation0]]
  $region30: #{_forward_layer.1} parent=0
    _
  %s8 = ssub.s32 1, %s6
  %s9 = scalar_select 0, %s8, %s6
  // Predicated region
  $region2: #{_forward_layer.1} parent=0 // pred_check
    _
  $region3: #{_forward_layer.1} parent=0 // pred_check_branch
    %11 = sbr.rel (0) target = $region5
  $region4: #{_forward_layer.1} parent=0 // pred_region
    _
  $region5: #{_forward_layer.1} parent=0 // pred_fallthru
    _
  // Predicated region
  $region6: #{_forward_layer.1} parent=0 // pred_check
    _
  $region7: #{_forward_layer.1} parent=0 // pred_check_branch
    %13 = sbr.rel (0) target = $region9
  $region8: #{_forward_layer.1} parent=0 // pred_region
    _
  $region9: #{_forward_layer.1} parent=0 // pred_fallthru
    _
  // Predicated region
  $region10: #{_forward_layer.1} parent=0 // pred_check
    _
  $region11: #{_forward_layer.1} parent=0 // pred_check_branch
    %15 = sbr.rel (0) target = $region13
  $region12: #{_forward_layer.1} parent=0 // pred_region
    _
  $region13: #{_forward_layer.1} parent=0 // pred_fallthru
    _
  // Predicated region
  $region14: #{_forward_layer.1} parent=0 // pred_check
    _
  $region15: #{_forward_layer.1} parent=0 // pred_check_branch
    %17 = sbr.rel (0) target = $region17
  $region16: #{_forward_layer.1} parent=0 // pred_region
    _
  $region17: #{_forward_layer.1} parent=0 // pred_fallthru
    _
  // Predicated region
  $region18: #{_forward_layer.1} parent=0 // pred_check
    _
  $region19: #{_forward_layer.1} parent=0 // pred_check_branch
    %19 = sbr.rel (0) target = $region21
  $region20: #{_forward_layer.1} parent=0 // pred_region
    _
  $region21: #{_forward_layer.1} parent=0 // pred_fallthru
    _
  %v21 = vld [vmem:[%s0] sm:$0x3]
  %v22 = vld [vmem:[%s1] sm:$0xff]
  %v23 = vld [vmem:[%s1 + $0x8] sm:$0xff]
  %v24 = vld [vmem:[%s1 + $0x10] sm:$0xff]
  %v25 = vld [vmem:[%s1 + $0x18] sm:$0xff]
  %v26 = vld [vmem:[%s1 + $0x20] sm:$0xff]
  %v27 = vld [vmem:[%s1 + $0x28] sm:$0xff]
  %v28 = vld [vmem:[%s1 + $0x30] sm:$0xff]
  %v29 = vld [vmem:[%s1 + $0x38] sm:$0xff]
  %v30 = vld [vmem:[%s1 + $0x40] sm:$0xff]
  %v31 = vld [vmem:[%s1 + $0x48] sm:$0xff]
  %v32 = vld [vmem:[%s1 + $0x50] sm:$0xff]
  %v33 = vld [vmem:[%s1 + $0x58] sm:$0xff]
  %v34 = vld [vmem:[%s1 + $0x60] sm:$0xff]
  %v35 = vld [vmem:[%s1 + $0x68] sm:$0xff]
  %v36 = vld [vmem:[%s1 + $0x70] sm:$0xff]
  %v37 = vld [vmem:[%s1 + $0x78] sm:$0xff]
  %v38 = vld [vmem:[%s1 + $0x80] sm:$0xff]
  %v39 = vld [vmem:[%s1 + $0x88] sm:$0xff]
  %v40 = vld [vmem:[%s1 + $0x90] sm:$0xff]
  %v41 = vld [vmem:[%s1 + $0x98] sm:$0xff]
  %v42 = vld [vmem:[%s1 + $0xa0] sm:$0xff]
  %v43 = vld [vmem:[%s1 + $0xa8] sm:$0xff]
  %v44 = vld [vmem:[%s1 + $0xb0] sm:$0xff]
  %v45 = vld [vmem:[%s1 + $0xb8] sm:$0xff]
  %v46 = vld [vmem:[%s1 + $0xc0] sm:$0xff]
  %v47 = vld [vmem:[%s1 + $0xc8] sm:$0xff]
  %v48 = vld [vmem:[%s1 + $0xd0] sm:$0xff]
  %v49 = vld [vmem:[%s1 + $0xd8] sm:$0xff]
  %v50 = vld [vmem:[%s1 + $0xe0] sm:$0xff]
  %v51 = vld [vmem:[%s1 + $0xe8] sm:$0xff]
  %v52 = vld [vmem:[%s1 + $0xf0] sm:$0xff]
  %v53 = vld [vmem:[%s1 + $0xf8] sm:$0xff]
  %v54 = vld [vmem:[%s1 + $0x100] sm:$0xff]
  %v55 = vld [vmem:[%s1 + $0x108] sm:$0xff]
  %v56 = vld [vmem:[%s1 + $0x110] sm:$0xff]
  %v57 = vld [vmem:[%s1 + $0x118] sm:$0xff]
  %v58 = vld [vmem:[%s1 + $0x120] sm:$0xff]
  %v59 = vld [vmem:[%s1 + $0x128] sm:$0xff]
  %v60 = vld [vmem:[%s1 + $0x130] sm:$0xff]
  %v61 = vld [vmem:[%s1 + $0x138] sm:$0xff]
  %v62 = vld [vmem:[%s1 + $0x140] sm:$0xff]
  %v63 = vld [vmem:[%s1 + $0x148] sm:$0xff]
  %v64 = vld [vmem:[%s1 + $0x150] sm:$0xff]
  %v65 = vld [vmem:[%s1 + $0x158] sm:$0xff]
  %v66 = vld [vmem:[%s1 + $0x160] sm:$0xff]
  %v67 = vld [vmem:[%s1 + $0x168] sm:$0xff]
  %v68 = vld [vmem:[%s1 + $0x170] sm:$0xff]
  %v69 = vld [vmem:[%s1 + $0x178] sm:$0xff]
  %v70 = vld [vmem:[%s1 + $0x180] sm:$0xff]
  %v71 = vld [vmem:[%s1 + $0x188] sm:$0xff]
  %v72 = vld [vmem:[%s1 + $0x190] sm:$0xff]
  %v73 = vld [vmem:[%s1 + $0x198] sm:$0xff]
  %v74 = vld [vmem:[%s1 + $0x1a0] sm:$0xff]
  %v75 = vld [vmem:[%s1 + $0x1a8] sm:$0xff]
  %v76 = vld [vmem:[%s1 + $0x1b0] sm:$0xff]
  %v77 = vld [vmem:[%s1 + $0x1b8] sm:$0xff]
  %v78 = vld [vmem:[%s1 + $0x1c0] sm:$0xff]
  %v79 = vld [vmem:[%s1 + $0x1c8] sm:$0xff]
  %v80 = vld [vmem:[%s1 + $0x1d0] sm:$0xff]
  %v81 = vld [vmem:[%s1 + $0x1d8] sm:$0xff]
  %v82 = vld [vmem:[%s1 + $0x1e0] sm:$0xff]
  %v83 = vld [vmem:[%s1 + $0x1e8] sm:$0xff]
  %v84 = vld [vmem:[%s1 + $0x1f0] sm:$0xff]
  %v85 = vld [vmem:[%s1 + $0x1f8] sm:$0xff]
  %v86 = vld [vmem:[%s1 + $0x200] sm:$0xff]
  %v87 = vld [vmem:[%s1 + $0x208] sm:$0xff]
  %v88 = vld [vmem:[%s1 + $0x210] sm:$0xff]
  %v89 = vld [vmem:[%s1 + $0x218] sm:$0xff]
  %v90 = vld [vmem:[%s1 + $0x220] sm:$0xff]
  %v91 = vld [vmem:[%s1 + $0x228] sm:$0xff]
  %v92 = vld [vmem:[%s1 + $0x230] sm:$0xff]
  %v93 = vld [vmem:[%s1 + $0x238] sm:$0xff]
  %v94 = vld [vmem:[%s1 + $0x240] sm:$0xff]
  %v95 = vld [vmem:[%s1 + $0x248] sm:$0xff]
  %v96 = vld [vmem:[%s1 + $0x250] sm:$0xff]
  %v97 = vld [vmem:[%s1 + $0x258] sm:$0xff]
  %v98 = vld [vmem:[%s1 + $0x260] sm:$0xff]
  %v99 = vld [vmem:[%s1 + $0x268] sm:$0xff]
  %v100 = vld [vmem:[%s1 + $0x270] sm:$0xff]
  %v101 = vld [vmem:[%s1 + $0x278] sm:$0xff]
  %v102 = vld [vmem:[%s1 + $0x280] sm:$0xff]
  %v103 = vld [vmem:[%s1 + $0x288] sm:$0xff]
  %v104 = vld [vmem:[%s1 + $0x290] sm:$0xff]
  %v105 = vld [vmem:[%s1 + $0x298] sm:$0xff]
  %v106 = vld [vmem:[%s1 + $0x2a0] sm:$0xff]
  %v107 = vld [vmem:[%s1 + $0x2a8] sm:$0xff]
  %v108 = vld [vmem:[%s1 + $0x2b0] sm:$0xff]
  %v109 = vld [vmem:[%s1 + $0x2b8] sm:$0xff]
  %v110 = vld [vmem:[%s1 + $0x2c0] sm:$0xff]
  %v111 = vld [vmem:[%s1 + $0x2c8] sm:$0xff]
  %v112 = vld [vmem:[%s1 + $0x2d0] sm:$0xff]
  %v113 = vld [vmem:[%s1 + $0x2d8] sm:$0xff]
  %v114 = vld [vmem:[%s1 + $0x2e0] sm:$0xff]
  %v115 = vld [vmem:[%s1 + $0x2e8] sm:$0xff]
  %v116 = vld [vmem:[%s1 + $0x2f0] sm:$0xff]
  %v117 = vld [vmem:[%s1 + $0x2f8] sm:$0xff]
  %v118 = vld [vmem:[%s1 + $0x300] sm:$0xff]
  %v119 = vld [vmem:[%s1 + $0x308] sm:$0xff]
  %v120 = vld [vmem:[%s1 + $0x310] sm:$0xff]
  %v121 = vld [vmem:[%s1 + $0x318] sm:$0xff]
  %v122 = vld [vmem:[%s1 + $0x320] sm:$0xff]
  %v123 = vld [vmem:[%s1 + $0x328] sm:$0xff]
  %v124 = vld [vmem:[%s1 + $0x330] sm:$0xff]
  %v125 = vld [vmem:[%s1 + $0x338] sm:$0xff]
  %v126 = vld [vmem:[%s1 + $0x340] sm:$0xff]
  %v127 = vld [vmem:[%s1 + $0x348] sm:$0xff]
  %v128 = vld [vmem:[%s1 + $0x350] sm:$0xff]
  %v129 = vld [vmem:[%s1 + $0x358] sm:$0xff]
  %v130 = vld [vmem:[%s1 + $0x360] sm:$0xff]
  %v131 = vld [vmem:[%s1 + $0x368] sm:$0xff]
  %v132 = vld [vmem:[%s1 + $0x370] sm:$0xff]
  %v133 = vld [vmem:[%s1 + $0x378] sm:$0xff]
  %v134 = vld [vmem:[%s1 + $0x380] sm:$0xff]
  %v135 = vld [vmem:[%s1 + $0x388] sm:$0xff]
  %v136 = vld [vmem:[%s1 + $0x390] sm:$0xff]
  %v137 = vld [vmem:[%s1 + $0x398] sm:$0xff]
  %v138 = vld [vmem:[%s1 + $0x3a0] sm:$0xff]
  %v139 = vld [vmem:[%s1 + $0x3a8] sm:$0xff]
  %v140 = vld [vmem:[%s1 + $0x3b0] sm:$0xff]
  %v141 = vld [vmem:[%s1 + $0x3b8] sm:$0xff]
  %v142 = vld [vmem:[%s1 + $0x3c0] sm:$0xff]
  %v143 = vld [vmem:[%s1 + $0x3c8] sm:$0xff]
  %v144 = vld [vmem:[%s1 + $0x3d0] sm:$0xff]
  %v145 = vld [vmem:[%s1 + $0x3d8] sm:$0xff]
  %v146 = vld [vmem:[%s1 + $0x3e0] sm:$0xff]
  %v147 = vld [vmem:[%s1 + $0x3e8] sm:$0xff]
  %v148 = vld [vmem:[%s1 + $0x3f0] sm:$0xff]
  %v149 = vld [vmem:[%s1 + $0x3f8] sm:$0xff]
  %v150 = vld [vmem:[%s1 + $0x400] sm:$0xff]
  %v151 = vld [vmem:[%s1 + $0x408] sm:$0xff]
  %v152 = vld [vmem:[%s1 + $0x410] sm:$0xff]
  %v153 = vld [vmem:[%s1 + $0x418] sm:$0xff]
  %v154 = vld [vmem:[%s1 + $0x420] sm:$0xff]
  %v155 = vld [vmem:[%s1 + $0x428] sm:$0xff]
  %v156 = vld [vmem:[%s1 + $0x430] sm:$0xff]
  %v157 = vld [vmem:[%s1 + $0x438] sm:$0xff]
  %v158 = vld [vmem:[%s1 + $0x440] sm:$0xff]
  %v159 = vld [vmem:[%s1 + $0x448] sm:$0xff]
  %v160 = vld [vmem:[%s1 + $0x450] sm:$0xff]
  %v161 = vld [vmem:[%s1 + $0x458] sm:$0xff]
  %v162 = vld [vmem:[%s1 + $0x460] sm:$0xff]
  %v163 = vld [vmem:[%s1 + $0x468] sm:$0xff]
  %v164 = vld [vmem:[%s1 + $0x470] sm:$0xff]
  %v165 = vld [vmem:[%s1 + $0x478] sm:$0xff]
  %v166 = vld [vmem:[%s1 + $0x480] sm:$0xff]
  %v167 = vld [vmem:[%s1 + $0x488] sm:$0xff]
  %v168 = vld [vmem:[%s1 + $0x490] sm:$0xff]
  %v169 = vld [vmem:[%s1 + $0x498] sm:$0xff]
  %v170 = vld [vmem:[%s1 + $0x4a0] sm:$0xff]
  %v171 = vld [vmem:[%s1 + $0x4a8] sm:$0xff]
  %v172 = vld [vmem:[%s1 + $0x4b0] sm:$0xff]
  %v173 = vld [vmem:[%s1 + $0x4b8] sm:$0xff]
  %v174 = vld [vmem:[%s1 + $0x4c0] sm:$0xff]
  %v175 = vld [vmem:[%s1 + $0x4c8] sm:$0xff]
  %v176 = vld [vmem:[%s1 + $0x4d0] sm:$0xff]
  %v177 = vld [vmem:[%s1 + $0x4d8] sm:$0xff]
  %v178 = vld [vmem:[%s1 + $0x4e0] sm:$0xff]
  %v179 = vld [vmem:[%s1 + $0x4e8] sm:$0xff]
  %v180 = vld [vmem:[%s1 + $0x4f0] sm:$0xff]
  %v181 = vld [vmem:[%s1 + $0x4f8] sm:$0xff]
  %v182 = vld [vmem:[%s1 + $0x500] sm:$0xff]
  %v183 = vld [vmem:[%s1 + $0x508] sm:$0xff]
  %185 = vst [vmem:[#allocation1] ss:$9 sm:$0xff] %v21
  %v186 = vld [vmem:[#allocation1] sm:$0xff]
  %v187 = vld [vmem:[#allocation1 + $0x9] sm:$0xff]
  %v351 = vunpack.c.l.b16 %v22
  %v352 = vunpack.c.h.b16 %v22
  %v353 = vunpack.c.l.b16 %v23
  %v354 = vunpack.c.h.b16 %v23
  %v355 = vunpack.c.l.b16 %v24
  %v356 = vunpack.c.h.b16 %v24
  %v357 = vunpack.c.l.b16 %v25
  %v358 = vunpack.c.h.b16 %v25
  %v359 = vunpack.c.l.b16 %v26
  %v360 = vunpack.c.h.b16 %v26
  %v361 = vunpack.c.l.b16 %v27
  %v362 = vunpack.c.h.b16 %v27
  %v363 = vunpack.c.l.b16 %v28
  %v364 = vunpack.c.h.b16 %v28
  %v365 = vunpack.c.l.b16 %v29
  %v366 = vunpack.c.h.b16 %v29
  %v367 = vunpack.c.l.b16 %v30
  %v368 = vunpack.c.h.b16 %v30
  %v369 = vunpack.c.l.b16 %v31
  %v370 = vunpack.c.h.b16 %v31
  %v371 = vunpack.c.l.b16 %v32
  %v372 = vunpack.c.h.b16 %v32
  %v373 = vunpack.c.l.b16 %v33
  %v374 = vunpack.c.h.b16 %v33
  %v375 = vunpack.c.l.b16 %v34
  %v376 = vunpack.c.h.b16 %v34
  %v377 = vunpack.c.l.b16 %v35
  %v378 = vunpack.c.h.b16 %v35
  %v379 = vunpack.c.l.b16 %v36
  %v380 = vunpack.c.h.b16 %v36
  %v381 = vunpack.c.l.b16 %v37
  %v382 = vunpack.c.h.b16 %v37
  %v383 = vunpack.c.l.b16 %v38
  %v384 = vunpack.c.h.b16 %v38
  %v385 = vunpack.c.l.b16 %v39
  %v386 = vunpack.c.h.b16 %v39
  %v387 = vunpack.c.l.b16 %v40
  %v388 = vunpack.c.h.b16 %v40
  %v389 = vunpack.c.l.b16 %v41
  %v390 = vunpack.c.h.b16 %v41
  %v391 = vunpack.c.l.b16 %v42
  %v392 = vunpack.c.h.b16 %v42
  %v393 = vunpack.c.l.b16 %v43
  %v394 = vunpack.c.h.b16 %v43
  %v395 = vunpack.c.l.b16 %v44
  %v396 = vunpack.c.h.b16 %v44
  %v397 = vunpack.c.l.b16 %v45
  %v398 = vunpack.c.h.b16 %v45
  %v399 = vunpack.c.l.b16 %v46
  %v400 = vunpack.c.h.b16 %v46
  %v401 = vunpack.c.l.b16 %v47
  %v402 = vunpack.c.h.b16 %v47
  %v403 = vunpack.c.l.b16 %v48
  %v404 = vunpack.c.h.b16 %v48
  %v405 = vunpack.c.l.b16 %v49
  %v406 = vunpack.c.h.b16 %v49
  %v407 = vunpack.c.l.b16 %v50
  %v408 = vunpack.c.h.b16 %v50
  %v409 = vunpack.c.l.b16 %v51
  %v410 = vunpack.c.h.b16 %v51
  %v411 = vunpack.c.l.b16 %v52
  %v412 = vunpack.c.h.b16 %v52
  %v413 = vunpack.c.l.b16 %v53
  %v414 = vunpack.c.h.b16 %v53
  %v415 = vunpack.c.l.b16 %v54
  %v416 = vunpack.c.h.b16 %v54
  %v417 = vunpack.c.l.b16 %v55
  %v418 = vunpack.c.h.b16 %v55
  %v419 = vunpack.c.l.b16 %v56
  %v420 = vunpack.c.h.b16 %v56
  %v421 = vunpack.c.l.b16 %v57
  %v422 = vunpack.c.h.b16 %v57
  %v423 = vunpack.c.l.b16 %v58
  %v424 = vunpack.c.h.b16 %v58
  %v425 = vunpack.c.l.b16 %v59
  %v426 = vunpack.c.h.b16 %v59
  %v427 = vunpack.c.l.b16 %v60
  %v428 = vunpack.c.h.b16 %v60
  %v429 = vunpack.c.l.b16 %v61
  %v430 = vunpack.c.h.b16 %v61
  %v431 = vunpack.c.l.b16 %v62
  %v432 = vunpack.c.h.b16 %v62
  %v433 = vunpack.c.l.b16 %v63
  %v434 = vunpack.c.h.b16 %v63
  %v435 = vunpack.c.l.b16 %v64
  %v436 = vunpack.c.h.b16 %v64
  %v437 = vunpack.c.l.b16 %v65
  %v438 = vunpack.c.h.b16 %v65
  %v439 = vunpack.c.l.b16 %v66
  %v440 = vunpack.c.h.b16 %v66
  %v441 = vunpack.c.l.b16 %v67
  %v442 = vunpack.c.h.b16 %v67
  %v443 = vunpack.c.l.b16 %v68
  %v444 = vunpack.c.h.b16 %v68
  %v445 = vunpack.c.l.b16 %v69
  %v446 = vunpack.c.h.b16 %v69
  %v447 = vunpack.c.l.b16 %v70
  %v448 = vunpack.c.h.b16 %v70
  %v449 = vunpack.c.l.b16 %v71
  %v450 = vunpack.c.h.b16 %v71
  %v451 = vunpack.c.l.b16 %v72
  %v452 = vunpack.c.h.b16 %v72
  %v453 = vunpack.c.l.b16 %v73
  %v454 = vunpack.c.h.b16 %v73
  %v455 = vunpack.c.l.b16 %v74
  %v456 = vunpack.c.h.b16 %v74
  %v457 = vunpack.c.l.b16 %v75
  %v458 = vunpack.c.h.b16 %v75
  %v459 = vunpack.c.l.b16 %v76
  %v460 = vunpack.c.h.b16 %v76
  %v461 = vunpack.c.l.b16 %v77
  %v462 = vunpack.c.h.b16 %v77
  %v463 = vunpack.c.l.b16 %v78
  %v464 = vunpack.c.h.b16 %v78
  %v465 = vunpack.c.l.b16 %v79
  %v466 = vunpack.c.h.b16 %v79
  %v467 = vunpack.c.l.b16 %v80
  %v468 = vunpack.c.h.b16 %v80
  %v469 = vunpack.c.l.b16 %v81
  %v470 = vunpack.c.h.b16 %v81
  %v471 = vunpack.c.l.b16 %v82
  %v472 = vunpack.c.h.b16 %v82
  %v473 = vunpack.c.l.b16 %v83
  %v474 = vunpack.c.h.b16 %v83
  %v475 = vunpack.c.l.b16 %v84
  %v476 = vunpack.c.h.b16 %v84
  %v477 = vunpack.c.l.b16 %v85
  %v478 = vunpack.c.h.b16 %v85
  %v479 = vunpack.c.l.b16 %v86
  %v480 = vunpack.c.h.b16 %v86
  %v481 = vunpack.c.l.b16 %v87
  %v482 = vunpack.c.h.b16 %v87
  %v483 = vunpack.c.l.b16 %v88
  %v484 = vunpack.c.h.b16 %v88
  %v485 = vunpack.c.l.b16 %v89
  %v486 = vunpack.c.h.b16 %v89
  %v487 = vunpack.c.l.b16 %v90
  %v488 = vunpack.c.h.b16 %v90
  %v489 = vunpack.c.l.b16 %v91
  %v490 = vunpack.c.h.b16 %v91
  %v491 = vunpack.c.l.b16 %v92
  %v492 = vunpack.c.h.b16 %v92
  %v493 = vunpack.c.l.b16 %v93
  %v494 = vunpack.c.h.b16 %v93
  %v495 = vunpack.c.l.b16 %v94
  %v496 = vunpack.c.h.b16 %v94
  %v497 = vunpack.c.l.b16 %v95
  %v498 = vunpack.c.h.b16 %v95
  %v499 = vunpack.c.l.b16 %v96
  %v500 = vunpack.c.h.b16 %v96
  %v501 = vunpack.c.l.b16 %v97
  %v502 = vunpack.c.h.b16 %v97
  %v503 = vunpack.c.l.b16 %v98
  %v504 = vunpack.c.h.b16 %v98
  %v505 = vunpack.c.l.b16 %v99
  %v506 = vunpack.c.h.b16 %v99
  %v507 = vunpack.c.l.b16 %v100
  %v508 = vunpack.c.h.b16 %v100
  %v509 = vunpack.c.l.b16 %v101
  %v510 = vunpack.c.h.b16 %v101
  %v511 = vunpack.c.l.b16 %v102
  %v512 = vunpack.c.h.b16 %v102
  %v513 = vunpack.c.l.b16 %v103
  %v514 = vunpack.c.h.b16 %v103
  %v515 = vunpack.c.l.b16 %v104
  %v516 = vunpack.c.h.b16 %v104
  %v517 = vunpack.c.l.b16 %v105
  %v518 = vunpack.c.h.b16 %v105
  %v519 = vunpack.c.l.b16 %v106
  %v520 = vunpack.c.h.b16 %v106
  %v521 = vunpack.c.l.b16 %v107
  %v522 = vunpack.c.h.b16 %v107
  %v523 = vunpack.c.l.b16 %v108
  %v524 = vunpack.c.h.b16 %v108
  %v525 = vunpack.c.l.b16 %v109
  %v526 = vunpack.c.h.b16 %v109
  %v527 = vunpack.c.l.b16 %v110
  %v528 = vunpack.c.h.b16 %v110
  %v529 = vunpack.c.l.b16 %v111
  %v530 = vunpack.c.h.b16 %v111
  %v531 = vunpack.c.l.b16 %v112
  %v532 = vunpack.c.h.b16 %v112
  %v533 = vunpack.c.l.b16 %v113
  %v534 = vunpack.c.h.b16 %v113
  %v535 = vunpack.c.l.b16 %v114
  %v536 = vunpack.c.h.b16 %v114
  %v537 = vunpack.c.l.b16 %v115
  %v538 = vunpack.c.h.b16 %v115
  %v539 = vunpack.c.l.b16 %v116
  %v540 = vunpack.c.h.b16 %v116
  %v541 = vunpack.c.l.b16 %v117
  %v542 = vunpack.c.h.b16 %v117
  %v543 = vunpack.c.l.b16 %v118
  %v544 = vunpack.c.h.b16 %v118
  %v545 = vunpack.c.l.b16 %v119
  %v546 = vunpack.c.h.b16 %v119
  %v547 = vunpack.c.l.b16 %v120
  %v548 = vunpack.c.h.b16 %v120
  %v549 = vunpack.c.l.b16 %v121
  %v550 = vunpack.c.h.b16 %v121
  %v551 = vunpack.c.l.b16 %v122
  %v552 = vunpack.c.h.b16 %v122
  %v553 = vunpack.c.l.b16 %v123
  %v554 = vunpack.c.h.b16 %v123
  %v555 = vunpack.c.l.b16 %v124
  %v556 = vunpack.c.h.b16 %v124
  %v557 = vunpack.c.l.b16 %v125
  %v558 = vunpack.c.h.b16 %v125
  %v559 = vunpack.c.l.b16 %v126
  %v560 = vunpack.c.h.b16 %v126
  %v561 = vunpack.c.l.b16 %v127
  %v562 = vunpack.c.h.b16 %v127
  %v563 = vunpack.c.l.b16 %v128
  %v564 = vunpack.c.h.b16 %v128
  %v565 = vunpack.c.l.b16 %v129
  %v566 = vunpack.c.h.b16 %v129
  %v567 = vunpack.c.l.b16 %v130
  %v568 = vunpack.c.h.b16 %v130
  %v569 = vunpack.c.l.b16 %v131
  %v570 = vunpack.c.h.b16 %v131
  %v571 = vunpack.c.l.b16 %v132
  %v572 = vunpack.c.h.b16 %v132
  %v573 = vunpack.c.l.b16 %v133
  %v574 = vunpack.c.h.b16 %v133
  %v575 = vunpack.c.l.b16 %v134
  %v576 = vunpack.c.h.b16 %v134
  %v577 = vunpack.c.l.b16 %v135
  %v578 = vunpack.c.h.b16 %v135
  %v579 = vunpack.c.l.b16 %v136
  %v580 = vunpack.c.h.b16 %v136
  %v581 = vunpack.c.l.b16 %v137
  %v582 = vunpack.c.h.b16 %v137
  %v583 = vunpack.c.l.b16 %v138
  %v584 = vunpack.c.h.b16 %v138
  %v585 = vunpack.c.l.b16 %v139
  %v586 = vunpack.c.h.b16 %v139
  %v587 = vunpack.c.l.b16 %v140
  %v588 = vunpack.c.h.b16 %v140
  %v589 = vunpack.c.l.b16 %v141
  %v590 = vunpack.c.h.b16 %v141
  %v591 = vunpack.c.l.b16 %v142
  %v592 = vunpack.c.h.b16 %v142
  %v593 = vunpack.c.l.b16 %v143
  %v594 = vunpack.c.h.b16 %v143
  %v595 = vunpack.c.l.b16 %v144
  %v596 = vunpack.c.h.b16 %v144
  %v597 = vunpack.c.l.b16 %v145
  %v598 = vunpack.c.h.b16 %v145
  %v599 = vunpack.c.l.b16 %v146
  %v600 = vunpack.c.h.b16 %v146
  %v601 = vunpack.c.l.b16 %v147
  %v602 = vunpack.c.h.b16 %v147
  %v603 = vunpack.c.l.b16 %v148
  %v604 = vunpack.c.h.b16 %v148
  %v605 = vunpack.c.l.b16 %v149
  %v606 = vunpack.c.h.b16 %v149
  %v607 = vunpack.c.l.b16 %v150
  %v608 = vunpack.c.h.b16 %v150
  %v609 = vunpack.c.l.b16 %v151
  %v610 = vunpack.c.h.b16 %v151
  %v611 = vunpack.c.l.b16 %v152
  %v612 = vunpack.c.h.b16 %v152
  %v613 = vunpack.c.l.b16 %v153
  %v614 = vunpack.c.h.b16 %v153
  %v615 = vunpack.c.l.b16 %v154
  %v616 = vunpack.c.h.b16 %v154
  %v617 = vunpack.c.l.b16 %v155
  %v618 = vunpack.c.h.b16 %v155
  %v619 = vunpack.c.l.b16 %v156
  %v620 = vunpack.c.h.b16 %v156
  %v621 = vunpack.c.l.b16 %v157
  %v622 = vunpack.c.h.b16 %v157
  %v623 = vunpack.c.l.b16 %v158
  %v624 = vunpack.c.h.b16 %v158
  %v625 = vunpack.c.l.b16 %v159
  %v626 = vunpack.c.h.b16 %v159
  %v627 = vunpack.c.l.b16 %v160
  %v628 = vunpack.c.h.b16 %v160
  %v629 = vunpack.c.l.b16 %v161
  %v630 = vunpack.c.h.b16 %v161
  %v631 = vunpack.c.l.b16 %v162
  %v632 = vunpack.c.h.b16 %v162
  %v633 = vunpack.c.l.b16 %v163
  %v634 = vunpack.c.h.b16 %v163
  %v635 = vunpack.c.l.b16 %v164
  %v636 = vunpack.c.h.b16 %v164
  %v637 = vunpack.c.l.b16 %v165
  %v638 = vunpack.c.h.b16 %v165
  %v639 = vunpack.c.l.b16 %v166
  %v640 = vunpack.c.h.b16 %v166
  %v641 = vunpack.c.l.b16 %v167
  %v642 = vunpack.c.h.b16 %v167
  %v643 = vunpack.c.l.b16 %v168
  %v644 = vunpack.c.h.b16 %v168
  %v645 = vunpack.c.l.b16 %v169
  %v646 = vunpack.c.h.b16 %v169
  %v647 = vunpack.c.l.b16 %v170
  %v648 = vunpack.c.h.b16 %v170
  %v649 = vunpack.c.l.b16 %v171
  %v650 = vunpack.c.h.b16 %v171
  %v651 = vunpack.c.l.b16 %v172
  %v652 = vunpack.c.h.b16 %v172
  %v653 = vunpack.c.l.b16 %v173
  %v654 = vunpack.c.h.b16 %v173
  %v655 = vunpack.c.l.b16 %v174
  %v656 = vunpack.c.h.b16 %v174
  %v657 = vunpack.c.l.b16 %v175
  %v658 = vunpack.c.h.b16 %v175
  %v659 = vunpack.c.l.b16 %v176
  %v660 = vunpack.c.h.b16 %v176
  %v661 = vunpack.c.l.b16 %v177
  %v662 = vunpack.c.h.b16 %v177
  %v663 = vunpack.c.l.b16 %v178
  %v664 = vunpack.c.h.b16 %v178
  %v665 = vunpack.c.l.b16 %v179
  %v666 = vunpack.c.h.b16 %v179
  %v667 = vunpack.c.l.b16 %v180
  %v668 = vunpack.c.h.b16 %v180
  %v669 = vunpack.c.l.b16 %v181
  %v670 = vunpack.c.h.b16 %v181
  %v671 = vunpack.c.l.b16 %v182
  %v672 = vunpack.c.h.b16 %v182
  %v673 = vunpack.c.l.b16 %v183
  %v674 = vunpack.c.h.b16 %v183
  %v675 = vpack.c.b16 %v369, %v351
  %v676 = vpack.c.b16 %v370, %v352
  %v677 = vpack.c.b16 %v371, %v353
  %v678 = vpack.c.b16 %v372, %v354
  %v679 = vpack.c.b16 %v373, %v355
  %v680 = vpack.c.b16 %v374, %v356
  %v681 = vpack.c.b16 %v375, %v357
  %v682 = vpack.c.b16 %v376, %v358
  %v683 = vpack.c.b16 %v377, %v359
  %v684 = vpack.c.b16 %v378, %v360
  %v685 = vpack.c.b16 %v379, %v361
  %v686 = vpack.c.b16 %v380, %v362
  %v687 = vpack.c.b16 %v381, %v363
  %v688 = vpack.c.b16 %v382, %v364
  %v689 = vpack.c.b16 %v383, %v365
  %v690 = vpack.c.b16 %v384, %v366
  %v691 = vpack.c.b16 %v385, %v367
  %v692 = vpack.c.b16 %v386, %v368
  %v693 = vpack.c.b16 %v405, %v387
  %v694 = vpack.c.b16 %v406, %v388
  %v695 = vpack.c.b16 %v407, %v389
  %v696 = vpack.c.b16 %v408, %v390
  %v697 = vpack.c.b16 %v409, %v391
  %v698 = vpack.c.b16 %v410, %v392
  %v699 = vpack.c.b16 %v411, %v393
  %v700 = vpack.c.b16 %v412, %v394
  %v701 = vpack.c.b16 %v413, %v395
  %v702 = vpack.c.b16 %v414, %v396
  %v703 = vpack.c.b16 %v415, %v397
  %v704 = vpack.c.b16 %v416, %v398
  %v705 = vpack.c.b16 %v417, %v399
  %v706 = vpack.c.b16 %v418, %v400
  %v707 = vpack.c.b16 %v419, %v401
  %v708 = vpack.c.b16 %v420, %v402
  %v709 = vpack.c.b16 %v421, %v403
  %v710 = vpack.c.b16 %v422, %v404
  %v711 = vpack.c.b16 %v441, %v423
  %v712 = vpack.c.b16 %v442, %v424
  %v713 = vpack.c.b16 %v443, %v425
  %v714 = vpack.c.b16 %v444, %v426
  %v715 = vpack.c.b16 %v445, %v427
  %v716 = vpack.c.b16 %v446, %v428
  %v717 = vpack.c.b16 %v447, %v429
  %v718 = vpack.c.b16 %v448, %v430
  %v719 = vpack.c.b16 %v449, %v431
  %v720 = vpack.c.b16 %v450, %v432
  %v721 = vpack.c.b16 %v451, %v433
  %v722 = vpack.c.b16 %v452, %v434
  %v723 = vpack.c.b16 %v453, %v435
  %v724 = vpack.c.b16 %v454, %v436
  %v725 = vpack.c.b16 %v455, %v437
  %v726 = vpack.c.b16 %v456, %v438
  %v727 = vpack.c.b16 %v457, %v439
  %v728 = vpack.c.b16 %v458, %v440
  %v729 = vpack.c.b16 %v477, %v459
  %v730 = vpack.c.b16 %v478, %v460
  %v731 = vpack.c.b16 %v479, %v461
  %v732 = vpack.c.b16 %v480, %v462
  %v733 = vpack.c.b16 %v481, %v463
  %v734 = vpack.c.b16 %v482, %v464
  %v735 = vpack.c.b16 %v483, %v465
  %v736 = vpack.c.b16 %v484, %v466
  %v737 = vpack.c.b16 %v485, %v467
  %v738 = vpack.c.b16 %v486, %v468
  %v739 = vpack.c.b16 %v487, %v469
  %v740 = vpack.c.b16 %v488, %v470
  %v741 = vpack.c.b16 %v489, %v471
  %v742 = vpack.c.b16 %v490, %v472
  %v743 = vpack.c.b16 %v491, %v473
  %v744 = vpack.c.b16 %v492, %v474
  %v745 = vpack.c.b16 %v493, %v475
  %v746 = vpack.c.b16 %v494, %v476
  %v747 = vpack.c.b16 %v513, %v495
  %v748 = vpack.c.b16 %v514, %v496
  %v749 = vpack.c.b16 %v515, %v497
  %v750 = vpack.c.b16 %v516, %v498
  %v751 = vpack.c.b16 %v517, %v499
  %v752 = vpack.c.b16 %v518, %v500
  %v753 = vpack.c.b16 %v519, %v501
  %v754 = vpack.c.b16 %v520, %v502
  %v755 = vpack.c.b16 %v521, %v503
  %v756 = vpack.c.b16 %v522, %v504
  %v757 = vpack.c.b16 %v523, %v505
  %v758 = vpack.c.b16 %v524, %v506
  %v759 = vpack.c.b16 %v525, %v507
  %v760 = vpack.c.b16 %v526, %v508
  %v761 = vpack.c.b16 %v527, %v509
  %v762 = vpack.c.b16 %v528, %v510
  %v763 = vpack.c.b16 %v529, %v511
  %v764 = vpack.c.b16 %v530, %v512
  %v765 = vpack.c.b16 %v549, %v531
  %v766 = vpack.c.b16 %v550, %v532
  %v767 = vpack.c.b16 %v551, %v533
  %v768 = vpack.c.b16 %v552, %v534
  %v769 = vpack.c.b16 %v553, %v535
  %v770 = vpack.c.b16 %v554, %v536
  %v771 = vpack.c.b16 %v555, %v537
  %v772 = vpack.c.b16 %v556, %v538
  %v773 = vpack.c.b16 %v557, %v539
  %v774 = vpack.c.b16 %v558, %v540
  %v775 = vpack.c.b16 %v559, %v541
  %v776 = vpack.c.b16 %v560, %v542
  %v777 = vpack.c.b16 %v561, %v543
  %v778 = vpack.c.b16 %v562, %v544
  %v779 = vpack.c.b16 %v563, %v545
  %v780 = vpack.c.b16 %v564, %v546
  %v781 = vpack.c.b16 %v565, %v547
  %v782 = vpack.c.b16 %v566, %v548
  %v783 = vpack.c.b16 %v585, %v567
  %v784 = vpack.c.b16 %v586, %v568
  %v785 = vpack.c.b16 %v587, %v569
  %v786 = vpack.c.b16 %v588, %v570
  %v787 = vpack.c.b16 %v589, %v571
  %v788 = vpack.c.b16 %v590, %v572
  %v789 = vpack.c.b16 %v591, %v573
  %v790 = vpack.c.b16 %v592, %v574
  %v791 = vpack.c.b16 %v593, %v575
  %v792 = vpack.c.b16 %v594, %v576
  %v793 = vpack.c.b16 %v595, %v577
  %v794 = vpack.c.b16 %v596, %v578
  %v795 = vpack.c.b16 %v597, %v579
  %v796 = vpack.c.b16 %v598, %v580
  %v797 = vpack.c.b16 %v599, %v581
  %v798 = vpack.c.b16 %v600, %v582
  %v799 = vpack.c.b16 %v601, %v583
  %v800 = vpack.c.b16 %v602, %v584
  %v801 = vpack.c.b16 %v621, %v603
  %v802 = vpack.c.b16 %v622, %v604
  %v803 = vpack.c.b16 %v623, %v605
  %v804 = vpack.c.b16 %v624, %v606
  %v805 = vpack.c.b16 %v625, %v607
  %v806 = vpack.c.b16 %v626, %v608
  %v807 = vpack.c.b16 %v627, %v609
  %v808 = vpack.c.b16 %v628, %v610
  %v809 = vpack.c.b16 %v629, %v611
  %v810 = vpack.c.b16 %v630, %v612
  %v811 = vpack.c.b16 %v631, %v613
  %v812 = vpack.c.b16 %v632, %v614
  %v813 = vpack.c.b16 %v633, %v615
  %v814 = vpack.c.b16 %v634, %v616
  %v815 = vpack.c.b16 %v635, %v617
  %v816 = vpack.c.b16 %v636, %v618
  %v817 = vpack.c.b16 %v637, %v619
  %v818 = vpack.c.b16 %v638, %v620
  %v819 = vpack.c.b16 %v657, %v639
  %v820 = vpack.c.b16 %v658, %v640
  %v821 = vpack.c.b16 %v659, %v641
  %v822 = vpack.c.b16 %v660, %v642
  %v823 = vpack.c.b16 %v661, %v643
  %v824 = vpack.c.b16 %v662, %v644
  %v825 = vpack.c.b16 %v663, %v645
  %v826 = vpack.c.b16 %v664, %v646
  %v827 = vpack.c.b16 %v665, %v647
  %v828 = vpack.c.b16 %v666, %v648
  %v829 = vpack.c.b16 %v667, %v649
  %v830 = vpack.c.b16 %v668, %v650
  %v831 = vpack.c.b16 %v669, %v651
  %v832 = vpack.c.b16 %v670, %v652
  %v833 = vpack.c.b16 %v671, %v653
  %v834 = vpack.c.b16 %v672, %v654
  %v835 = vpack.c.b16 %v673, %v655
  %v836 = vpack.c.b16 %v674, %v656
  %vm999 = vcmask 130048
  %v1000 = vsel %vm999, %v187, 0
  %1002 = vmatpush.bf16.msra.mxu0 %v801
  %1003 = vmatpush.bf16.msra.mxu0 %v783
  %1004 = vmatpush.bf16.msra.mxu0 %v765
  %1005 = vmatpush.bf16.msra.mxu0 %v747
  %1006 = vmatpush.bf16.msra.mxu0 %v729
  %1007 = vmatpush.bf16.msra.mxu0 %v711
  %1008 = vmatpush.bf16.msra.mxu0 %v693
  %1009 = vmatpush.bf16.msra.mxu0 %v675
  %1010 = vmatmul.bf16.gmra.mxu0 %v186
  %v1011 = vpop.f32.mrf.mxu0
  %v1012 = vadd.f32 0.0, %v1011
  %v1013 = vpop.f32.mrf.mxu0
  %1014 = vdwg.mxu0
  %1015 = vmatpush.bf16.msra.mxu0 0
  %1016 = vmatpush.bf16.msra.mxu0 0
  %1017 = vmatpush.bf16.msra.mxu0 0
  %1018 = vmatpush.bf16.msra.mxu0 0
  %1019 = vmatpush.bf16.msra.mxu0 0
  %1020 = vmatpush.bf16.msra.mxu0 0
  %1021 = vmatpush.bf16.msra.mxu0 0
  %1022 = vmatpush.bf16.msra.mxu0 %v819
  %1023 = vmatmul.bf16.gmra.mxu0 %v1000
  %v1024 = vpop.f32.mrf.mxu0
  %v1025 = vadd.f32 %v1012, %v1024
  %v1026 = vpop.f32.mrf.mxu0
  %1027 = vdwg.mxu0
  %1028 = vmatpush.bf16.msra.mxu0 %v802
  %1029 = vmatpush.bf16.msra.mxu0 %v784
  %1030 = vmatpush.bf16.msra.mxu0 %v766
  %1031 = vmatpush.bf16.msra.mxu0 %v748
  %1032 = vmatpush.bf16.msra.mxu0 %v730
  %1033 = vmatpush.bf16.msra.mxu0 %v712
  %1034 = vmatpush.bf16.msra.mxu0 %v694
  %1035 = vmatpush.bf16.msra.mxu0 %v676
  %1036 = vmatmul.bf16.gmra.mxu0 %v186
  %v1037 = vpop.f32.mrf.mxu0
  %v1038 = vadd.f32 0.0, %v1037
  %v1039 = vpop.f32.mrf.mxu0
  %1040 = vdwg.mxu0
  %1041 = vmatpush.bf16.msra.mxu0 0
  %1042 = vmatpush.bf16.msra.mxu0 0
  %1043 = vmatpush.bf16.msra.mxu0 0
  %1044 = vmatpush.bf16.msra.mxu0 0
  %1045 = vmatpush.bf16.msra.mxu0 0
  %1046 = vmatpush.bf16.msra.mxu0 0
  %1047 = vmatpush.bf16.msra.mxu0 0
  %1048 = vmatpush.bf16.msra.mxu0 %v820
  %1049 = vmatmul.bf16.gmra.mxu0 %v1000
  %v1050 = vpop.f32.mrf.mxu0
  %v1051 = vadd.f32 %v1038, %v1050
  %v1052 = vpop.f32.mrf.mxu0
  %1053 = vdwg.mxu0
  %1054 = vmatpush.bf16.msra.mxu0 %v803
  %1055 = vmatpush.bf16.msra.mxu0 %v785
  %1056 = vmatpush.bf16.msra.mxu0 %v767
  %1057 = vmatpush.bf16.msra.mxu0 %v749
  %1058 = vmatpush.bf16.msra.mxu0 %v731
  %1059 = vmatpush.bf16.msra.mxu0 %v713
  %1060 = vmatpush.bf16.msra.mxu0 %v695
  %1061 = vmatpush.bf16.msra.mxu0 %v677
  %1062 = vmatmul.bf16.gmra.mxu0 %v186
  %v1063 = vpop.f32.mrf.mxu0
  %v1064 = vadd.f32 0.0, %v1063
  %v1065 = vpop.f32.mrf.mxu0
  %1066 = vdwg.mxu0
  %1067 = vmatpush.bf16.msra.mxu0 0
  %1068 = vmatpush.bf16.msra.mxu0 0
  %1069 = vmatpush.bf16.msra.mxu0 0
  %1070 = vmatpush.bf16.msra.mxu0 0
  %1071 = vmatpush.bf16.msra.mxu0 0
  %1072 = vmatpush.bf16.msra.mxu0 0
  %1073 = vmatpush.bf16.msra.mxu0 0
  %1074 = vmatpush.bf16.msra.mxu0 %v821
  %1075 = vmatmul.bf16.gmra.mxu0 %v1000
  %v1076 = vpop.f32.mrf.mxu0
  %v1077 = vadd.f32 %v1064, %v1076
  %v1078 = vpop.f32.mrf.mxu0
  %1079 = vdwg.mxu0
  %1080 = vmatpush.bf16.msra.mxu0 %v804
  %1081 = vmatpush.bf16.msra.mxu0 %v786
  %1082 = vmatpush.bf16.msra.mxu0 %v768
  %1083 = vmatpush.bf16.msra.mxu0 %v750
  %1084 = vmatpush.bf16.msra.mxu0 %v732
  %1085 = vmatpush.bf16.msra.mxu0 %v714
  %1086 = vmatpush.bf16.msra.mxu0 %v696
  %1087 = vmatpush.bf16.msra.mxu0 %v678
  %1088 = vmatmul.bf16.gmra.mxu0 %v186
  %v1089 = vpop.f32.mrf.mxu0
  %v1090 = vadd.f32 0.0, %v1089
  %v1091 = vpop.f32.mrf.mxu0
  %1092 = vdwg.mxu0
  %1093 = vmatpush.bf16.msra.mxu0 0
  %1094 = vmatpush.bf16.msra.mxu0 0
  %1095 = vmatpush.bf16.msra.mxu0 0
  %1096 = vmatpush.bf16.msra.mxu0 0
  %1097 = vmatpush.bf16.msra.mxu0 0
  %1098 = vmatpush.bf16.msra.mxu0 0
  %1099 = vmatpush.bf16.msra.mxu0 0
  %1100 = vmatpush.bf16.msra.mxu0 %v822
  %1101 = vmatmul.bf16.gmra.mxu0 %v1000
  %v1102 = vpop.f32.mrf.mxu0
  %v1103 = vadd.f32 %v1090, %v1102
  %v1104 = vpop.f32.mrf.mxu0
  %1105 = vdwg.mxu0
  %1106 = vmatpush.bf16.msra.mxu0 %v805
  %1107 = vmatpush.bf16.msra.mxu0 %v787
  %1108 = vmatpush.bf16.msra.mxu0 %v769
  %1109 = vmatpush.bf16.msra.mxu0 %v751
  %1110 = vmatpush.bf16.msra.mxu0 %v733
  %1111 = vmatpush.bf16.msra.mxu0 %v715
  %1112 = vmatpush.bf16.msra.mxu0 %v697
  %1113 = vmatpush.bf16.msra.mxu0 %v679
  %1114 = vmatmul.bf16.gmra.mxu0 %v186
  %v1115 = vpop.f32.mrf.mxu0
  %v1116 = vadd.f32 0.0, %v1115
  %v1117 = vpop.f32.mrf.mxu0
  %1118 = vdwg.mxu0
  %1119 = vmatpush.bf16.msra.mxu0 0
  %1120 = vmatpush.bf16.msra.mxu0 0
  %1121 = vmatpush.bf16.msra.mxu0 0
  %1122 = vmatpush.bf16.msra.mxu0 0
  %1123 = vmatpush.bf16.msra.mxu0 0
  %1124 = vmatpush.bf16.msra.mxu0 0
  %1125 = vmatpush.bf16.msra.mxu0 0
  %1126 = vmatpush.bf16.msra.mxu0 %v823
  %1127 = vmatmul.bf16.gmra.mxu0 %v1000
  %v1128 = vpop.f32.mrf.mxu0
  %v1129 = vadd.f32 %v1116, %v1128
  %v1130 = vpop.f32.mrf.mxu0
  %1131 = vdwg.mxu0
  %1132 = vmatpush.bf16.msra.mxu0 %v806
  %1133 = vmatpush.bf16.msra.mxu0 %v788
  %1134 = vmatpush.bf16.msra.mxu0 %v770
  %1135 = vmatpush.bf16.msra.mxu0 %v752
  %1136 = vmatpush.bf16.msra.mxu0 %v734
  %1137 = vmatpush.bf16.msra.mxu0 %v716
  %1138 = vmatpush.bf16.msra.mxu0 %v698
  %1139 = vmatpush.bf16.msra.mxu0 %v680
  %1140 = vmatmul.bf16.gmra.mxu0 %v186
  %v1141 = vpop.f32.mrf.mxu0
  %v1142 = vadd.f32 0.0, %v1141
  %v1143 = vpop.f32.mrf.mxu0
  %1144 = vdwg.mxu0
  %1145 = vmatpush.bf16.msra.mxu0 0
  %1146 = vmatpush.bf16.msra.mxu0 0
  %1147 = vmatpush.bf16.msra.mxu0 0
  %1148 = vmatpush.bf16.msra.mxu0 0
  %1149 = vmatpush.bf16.msra.mxu0 0
  %1150 = vmatpush.bf16.msra.mxu0 0
  %1151 = vmatpush.bf16.msra.mxu0 0
  %1152 = vmatpush.bf16.msra.mxu0 %v824
  %1153 = vmatmul.bf16.gmra.mxu0 %v1000
  %v1154 = vpop.f32.mrf.mxu0
  %v1155 = vadd.f32 %v1142, %v1154
  %v1156 = vpop.f32.mrf.mxu0
  %1157 = vdwg.mxu0
  %1158 = vmatpush.bf16.msra.mxu0 %v807
  %1159 = vmatpush.bf16.msra.mxu0 %v789
  %1160 = vmatpush.bf16.msra.mxu0 %v771
  %1161 = vmatpush.bf16.msra.mxu0 %v753
  %1162 = vmatpush.bf16.msra.mxu0 %v735
  %1163 = vmatpush.bf16.msra.mxu0 %v717
  %1164 = vmatpush.bf16.msra.mxu0 %v699
  %1165 = vmatpush.bf16.msra.mxu0 %v681
  %1166 = vmatmul.bf16.gmra.mxu0 %v186
  %v1167 = vpop.f32.mrf.mxu0
  %v1168 = vadd.f32 0.0, %v1167
  %v1169 = vpop.f32.mrf.mxu0
  %1170 = vdwg.mxu0
  %1171 = vmatpush.bf16.msra.mxu0 0
  %1172 = vmatpush.bf16.msra.mxu0 0
  %1173 = vmatpush.bf16.msra.mxu0 0
  %1174 = vmatpush.bf16.msra.mxu0 0
  %1175 = vmatpush.bf16.msra.mxu0 0
  %1176 = vmatpush.bf16.msra.mxu0 0
  %1177 = vmatpush.bf16.msra.mxu0 0
  %1178 = vmatpush.bf16.msra.mxu0 %v825
  %1179 = vmatmul.bf16.gmra.mxu0 %v1000
  %v1180 = vpop.f32.mrf.mxu0
  %v1181 = vadd.f32 %v1168, %v1180
  %v1182 = vpop.f32.mrf.mxu0
  %1183 = vdwg.mxu0
  %1184 = vmatpush.bf16.msra.mxu0 %v808
  %1185 = vmatpush.bf16.msra.mxu0 %v790
  %1186 = vmatpush.bf16.msra.mxu0 %v772
  %1187 = vmatpush.bf16.msra.mxu0 %v754
  %1188 = vmatpush.bf16.msra.mxu0 %v736
  %1189 = vmatpush.bf16.msra.mxu0 %v718
  %1190 = vmatpush.bf16.msra.mxu0 %v700
  %1191 = vmatpush.bf16.msra.mxu0 %v682
  %1192 = vmatmul.bf16.gmra.mxu0 %v186
  %v1193 = vpop.f32.mrf.mxu0
  %v1194 = vadd.f32 0.0, %v1193
  %v1195 = vpop.f32.mrf.mxu0
  %1196 = vdwg.mxu0
  %1197 = vmatpush.bf16.msra.mxu0 0
  %1198 = vmatpush.bf16.msra.mxu0 0
  %1199 = vmatpush.bf16.msra.mxu0 0
  %1200 = vmatpush.bf16.msra.mxu0 0
  %1201 = vmatpush.bf16.msra.mxu0 0
  %1202 = vmatpush.bf16.msra.mxu0 0
  %1203 = vmatpush.bf16.msra.mxu0 0
  %1204 = vmatpush.bf16.msra.mxu0 %v826
  %1205 = vmatmul.bf16.gmra.mxu0 %v1000
  %v1206 = vpop.f32.mrf.mxu0
  %v1207 = vadd.f32 %v1194, %v1206
  %v1208 = vpop.f32.mrf.mxu0
  %1209 = vdwg.mxu0
  %1210 = vmatpush.bf16.msra.mxu0 %v809
  %1211 = vmatpush.bf16.msra.mxu0 %v791
  %1212 = vmatpush.bf16.msra.mxu0 %v773
  %1213 = vmatpush.bf16.msra.mxu0 %v755
  %1214 = vmatpush.bf16.msra.mxu0 %v737
  %1215 = vmatpush.bf16.msra.mxu0 %v719
  %1216 = vmatpush.bf16.msra.mxu0 %v701
  %1217 = vmatpush.bf16.msra.mxu0 %v683
  %1218 = vmatmul.bf16.gmra.mxu0 %v186
  %v1219 = vpop.f32.mrf.mxu0
  %v1220 = vadd.f32 0.0, %v1219
  %v1221 = vpop.f32.mrf.mxu0
  %1222 = vdwg.mxu0
  %1223 = vmatpush.bf16.msra.mxu0 0
  %1224 = vmatpush.bf16.msra.mxu0 0
  %1225 = vmatpush.bf16.msra.mxu0 0
  %1226 = vmatpush.bf16.msra.mxu0 0
  %1227 = vmatpush.bf16.msra.mxu0 0
  %1228 = vmatpush.bf16.msra.mxu0 0
  %1229 = vmatpush.bf16.msra.mxu0 0
  %1230 = vmatpush.bf16.msra.mxu0 %v827
  %1231 = vmatmul.bf16.gmra.mxu0 %v1000
  %v1232 = vpop.f32.mrf.mxu0
  %v1233 = vadd.f32 %v1220, %v1232
  %v1234 = vpop.f32.mrf.mxu0
  %1235 = vdwg.mxu0
  %1236 = vmatpush.bf16.msra.mxu0 %v810
  %1237 = vmatpush.bf16.msra.mxu0 %v792
  %1238 = vmatpush.bf16.msra.mxu0 %v774
  %1239 = vmatpush.bf16.msra.mxu0 %v756
  %1240 = vmatpush.bf16.msra.mxu0 %v738
  %1241 = vmatpush.bf16.msra.mxu0 %v720
  %1242 = vmatpush.bf16.msra.mxu0 %v702
  %1243 = vmatpush.bf16.msra.mxu0 %v684
  %1244 = vmatmul.bf16.gmra.mxu0 %v186
  %v1245 = vpop.f32.mrf.mxu0
  %v1246 = vadd.f32 0.0, %v1245
  %v1247 = vpop.f32.mrf.mxu0
  %1248 = vdwg.mxu0
  %1249 = vmatpush.bf16.msra.mxu0 0
  %1250 = vmatpush.bf16.msra.mxu0 0
  %1251 = vmatpush.bf16.msra.mxu0 0
  %1252 = vmatpush.bf16.msra.mxu0 0
  %1253 = vmatpush.bf16.msra.mxu0 0
  %1254 = vmatpush.bf16.msra.mxu0 0
  %1255 = vmatpush.bf16.msra.mxu0 0
  %1256 = vmatpush.bf16.msra.mxu0 %v828
  %1257 = vmatmul.bf16.gmra.mxu0 %v1000
  %v1258 = vpop.f32.mrf.mxu0
  %v1259 = vadd.f32 %v1246, %v1258
  %v1260 = vpop.f32.mrf.mxu0
  %1261 = vdwg.mxu0
  %1262 = vmatpush.bf16.msra.mxu0 %v811
  %1263 = vmatpush.bf16.msra.mxu0 %v793
  %1264 = vmatpush.bf16.msra.mxu0 %v775
  %1265 = vmatpush.bf16.msra.mxu0 %v757
  %1266 = vmatpush.bf16.msra.mxu0 %v739
  %1267 = vmatpush.bf16.msra.mxu0 %v721
  %1268 = vmatpush.bf16.msra.mxu0 %v703
  %1269 = vmatpush.bf16.msra.mxu0 %v685
  %1270 = vmatmul.bf16.gmra.mxu0 %v186
  %v1271 = vpop.f32.mrf.mxu0
  %v1272 = vadd.f32 0.0, %v1271
  %v1273 = vpop.f32.mrf.mxu0
  %1274 = vdwg.mxu0
  %1275 = vmatpush.bf16.msra.mxu0 0
  %1276 = vmatpush.bf16.msra.mxu0 0
  %1277 = vmatpush.bf16.msra.mxu0 0
  %1278 = vmatpush.bf16.msra.mxu0 0
  %1279 = vmatpush.bf16.msra.mxu0 0
  %1280 = vmatpush.bf16.msra.mxu0 0
  %1281 = vmatpush.bf16.msra.mxu0 0
  %1282 = vmatpush.bf16.msra.mxu0 %v829
  %1283 = vmatmul.bf16.gmra.mxu0 %v1000
  %v1284 = vpop.f32.mrf.mxu0
  %v1285 = vadd.f32 %v1272, %v1284
  %v1286 = vpop.f32.mrf.mxu0
  %1287 = vdwg.mxu0
  %1288 = vmatpush.bf16.msra.mxu0 %v812
  %1289 = vmatpush.bf16.msra.mxu0 %v794
  %1290 = vmatpush.bf16.msra.mxu0 %v776
  %1291 = vmatpush.bf16.msra.mxu0 %v758
  %1292 = vmatpush.bf16.msra.mxu0 %v740
  %1293 = vmatpush.bf16.msra.mxu0 %v722
  %1294 = vmatpush.bf16.msra.mxu0 %v704
  %1295 = vmatpush.bf16.msra.mxu0 %v686
  %1296 = vmatmul.bf16.gmra.mxu0 %v186
  %v1297 = vpop.f32.mrf.mxu0
  %v1298 = vadd.f32 0.0, %v1297
  %v1299 = vpop.f32.mrf.mxu0
  %1300 = vdwg.mxu0
  %1301 = vmatpush.bf16.msra.mxu0 0
  %1302 = vmatpush.bf16.msra.mxu0 0
  %1303 = vmatpush.bf16.msra.mxu0 0
  %1304 = vmatpush.bf16.msra.mxu0 0
  %1305 = vmatpush.bf16.msra.mxu0 0
  %1306 = vmatpush.bf16.msra.mxu0 0
  %1307 = vmatpush.bf16.msra.mxu0 0
  %1308 = vmatpush.bf16.msra.mxu0 %v830
  %1309 = vmatmul.bf16.gmra.mxu0 %v1000
  %v1310 = vpop.f32.mrf.mxu0
  %v1311 = vadd.f32 %v1298, %v1310
  %v1312 = vpop.f32.mrf.mxu0
  %1313 = vdwg.mxu0
  %1314 = vmatpush.bf16.msra.mxu0 %v813
  %1315 = vmatpush.bf16.msra.mxu0 %v795
  %1316 = vmatpush.bf16.msra.mxu0 %v777
  %1317 = vmatpush.bf16.msra.mxu0 %v759
  %1318 = vmatpush.bf16.msra.mxu0 %v741
  %1319 = vmatpush.bf16.msra.mxu0 %v723
  %1320 = vmatpush.bf16.msra.mxu0 %v705
  %1321 = vmatpush.bf16.msra.mxu0 %v687
  %1322 = vmatmul.bf16.gmra.mxu0 %v186
  %v1323 = vpop.f32.mrf.mxu0
  %v1324 = vadd.f32 0.0, %v1323
  %v1325 = vpop.f32.mrf.mxu0
  %1326 = vdwg.mxu0
  %1327 = vmatpush.bf16.msra.mxu0 0
  %1328 = vmatpush.bf16.msra.mxu0 0
  %1329 = vmatpush.bf16.msra.mxu0 0
  %1330 = vmatpush.bf16.msra.mxu0 0
  %1331 = vmatpush.bf16.msra.mxu0 0
  %1332 = vmatpush.bf16.msra.mxu0 0
  %1333 = vmatpush.bf16.msra.mxu0 0
  %1334 = vmatpush.bf16.msra.mxu0 %v831
  %1335 = vmatmul.bf16.gmra.mxu0 %v1000
  %v1336 = vpop.f32.mrf.mxu0
  %v1337 = vadd.f32 %v1324, %v1336
  %v1338 = vpop.f32.mrf.mxu0
  %1339 = vdwg.mxu0
  %1340 = vmatpush.bf16.msra.mxu0 %v814
  %1341 = vmatpush.bf16.msra.mxu0 %v796
  %1342 = vmatpush.bf16.msra.mxu0 %v778
  %1343 = vmatpush.bf16.msra.mxu0 %v760
  %1344 = vmatpush.bf16.msra.mxu0 %v742
  %1345 = vmatpush.bf16.msra.mxu0 %v724
  %1346 = vmatpush.bf16.msra.mxu0 %v706
  %1347 = vmatpush.bf16.msra.mxu0 %v688
  %1348 = vmatmul.bf16.gmra.mxu0 %v186
  %v1349 = vpop.f32.mrf.mxu0
  %v1350 = vadd.f32 0.0, %v1349
  %v1351 = vpop.f32.mrf.mxu0
  %1352 = vdwg.mxu0
  %1353 = vmatpush.bf16.msra.mxu0 0
  %1354 = vmatpush.bf16.msra.mxu0 0
  %1355 = vmatpush.bf16.msra.mxu0 0
  %1356 = vmatpush.bf16.msra.mxu0 0
  %1357 = vmatpush.bf16.msra.mxu0 0
  %1358 = vmatpush.bf16.msra.mxu0 0
  %1359 = vmatpush.bf16.msra.mxu0 0
  %1360 = vmatpush.bf16.msra.mxu0 %v832
  %1361 = vmatmul.bf16.gmra.mxu0 %v1000
  %v1362 = vpop.f32.mrf.mxu0
  %v1363 = vadd.f32 %v1350, %v1362
  %v1364 = vpop.f32.mrf.mxu0
  %1365 = vdwg.mxu0
  %1366 = vmatpush.bf16.msra.mxu0 %v815
  %1367 = vmatpush.bf16.msra.mxu0 %v797
  %1368 = vmatpush.bf16.msra.mxu0 %v779
  %1369 = vmatpush.bf16.msra.mxu0 %v761
  %1370 = vmatpush.bf16.msra.mxu0 %v743
  %1371 = vmatpush.bf16.msra.mxu0 %v725
  %1372 = vmatpush.bf16.msra.mxu0 %v707
  %1373 = vmatpush.bf16.msra.mxu0 %v689
  %1374 = vmatmul.bf16.gmra.mxu0 %v186
  %v1375 = vpop.f32.mrf.mxu0
  %v1376 = vadd.f32 0.0, %v1375
  %v1377 = vpop.f32.mrf.mxu0
  %1378 = vdwg.mxu0
  %1379 = vmatpush.bf16.msra.mxu0 0
  %1380 = vmatpush.bf16.msra.mxu0 0
  %1381 = vmatpush.bf16.msra.mxu0 0
  %1382 = vmatpush.bf16.msra.mxu0 0
  %1383 = vmatpush.bf16.msra.mxu0 0
  %1384 = vmatpush.bf16.msra.mxu0 0
  %1385 = vmatpush.bf16.msra.mxu0 0
  %1386 = vmatpush.bf16.msra.mxu0 %v833
  %1387 = vmatmul.bf16.gmra.mxu0 %v1000
  %v1388 = vpop.f32.mrf.mxu0
  %v1389 = vadd.f32 %v1376, %v1388
  %v1390 = vpop.f32.mrf.mxu0
  %1391 = vdwg.mxu0
  %1392 = vmatpush.bf16.msra.mxu0 %v816
  %1393 = vmatpush.bf16.msra.mxu0 %v798
  %1394 = vmatpush.bf16.msra.mxu0 %v780
  %1395 = vmatpush.bf16.msra.mxu0 %v762
  %1396 = vmatpush.bf16.msra.mxu0 %v744
  %1397 = vmatpush.bf16.msra.mxu0 %v726
  %1398 = vmatpush.bf16.msra.mxu0 %v708
  %1399 = vmatpush.bf16.msra.mxu0 %v690
  %1400 = vmatmul.bf16.gmra.mxu0 %v186
  %v1401 = vpop.f32.mrf.mxu0
  %v1402 = vadd.f32 0.0, %v1401
  %v1403 = vpop.f32.mrf.mxu0
  %1404 = vdwg.mxu0
  %1405 = vmatpush.bf16.msra.mxu0 0
  %1406 = vmatpush.bf16.msra.mxu0 0
  %1407 = vmatpush.bf16.msra.mxu0 0
  %1408 = vmatpush.bf16.msra.mxu0 0
  %1409 = vmatpush.bf16.msra.mxu0 0
  %1410 = vmatpush.bf16.msra.mxu0 0
  %1411 = vmatpush.bf16.msra.mxu0 0
  %1412 = vmatpush.bf16.msra.mxu0 %v834
  %1413 = vmatmul.bf16.gmra.mxu0 %v1000
  %v1414 = vpop.f32.mrf.mxu0
  %v1415 = vadd.f32 %v1402, %v1414
  %v1416 = vpop.f32.mrf.mxu0
  %1417 = vdwg.mxu0
  %1418 = vmatpush.bf16.msra.mxu0 %v817
  %1419 = vmatpush.bf16.msra.mxu0 %v799
  %1420 = vmatpush.bf16.msra.mxu0 %v781
  %1421 = vmatpush.bf16.msra.mxu0 %v763
  %1422 = vmatpush.bf16.msra.mxu0 %v745
  %1423 = vmatpush.bf16.msra.mxu0 %v727
  %1424 = vmatpush.bf16.msra.mxu0 %v709
  %1425 = vmatpush.bf16.msra.mxu0 %v691
  %1426 = vmatmul.bf16.gmra.mxu0 %v186
  %v1427 = vpop.f32.mrf.mxu0
  %v1428 = vadd.f32 0.0, %v1427
  %v1429 = vpop.f32.mrf.mxu0
  %1430 = vdwg.mxu0
  %1431 = vmatpush.bf16.msra.mxu0 0
  %1432 = vmatpush.bf16.msra.mxu0 0
  %1433 = vmatpush.bf16.msra.mxu0 0
  %1434 = vmatpush.bf16.msra.mxu0 0
  %1435 = vmatpush.bf16.msra.mxu0 0
  %1436 = vmatpush.bf16.msra.mxu0 0
  %1437 = vmatpush.bf16.msra.mxu0 0
  %1438 = vmatpush.bf16.msra.mxu0 %v835
  %1439 = vmatmul.bf16.gmra.mxu0 %v1000
  %v1440 = vpop.f32.mrf.mxu0
  %v1441 = vadd.f32 %v1428, %v1440
  %v1442 = vpop.f32.mrf.mxu0
  %1443 = vdwg.mxu0
  %1444 = vmatpush.bf16.msra.mxu0 %v818
  %1445 = vmatpush.bf16.msra.mxu0 %v800
  %1446 = vmatpush.bf16.msra.mxu0 %v782
  %1447 = vmatpush.bf16.msra.mxu0 %v764
  %1448 = vmatpush.bf16.msra.mxu0 %v746
  %1449 = vmatpush.bf16.msra.mxu0 %v728
  %1450 = vmatpush.bf16.msra.mxu0 %v710
  %1451 = vmatpush.bf16.msra.mxu0 %v692
  %1452 = vmatmul.bf16.gmra.mxu0 %v186
  %v1453 = vpop.f32.mrf.mxu0
  %v1454 = vadd.f32 0.0, %v1453
  %v1455 = vpop.f32.mrf.mxu0
  %1456 = vdwg.mxu0
  %1457 = vmatpush.bf16.msra.mxu0 0
  %1458 = vmatpush.bf16.msra.mxu0 0
  %1459 = vmatpush.bf16.msra.mxu0 0
  %1460 = vmatpush.bf16.msra.mxu0 0
  %1461 = vmatpush.bf16.msra.mxu0 0
  %1462 = vmatpush.bf16.msra.mxu0 0
  %1463 = vmatpush.bf16.msra.mxu0 0
  %1464 = vmatpush.bf16.msra.mxu0 %v836
  %1465 = vmatmul.bf16.gmra.mxu0 %v1000
  %v1466 = vpop.f32.mrf.mxu0
  %v1467 = vadd.f32 %v1454, %v1466
  %v1468 = vpop.f32.mrf.mxu0
  %1469 = vdwg.mxu0
  %v1470 = vld [vmem:[%s2] sm:$0xff]
  %v1471 = vld [vmem:[%s2 + $0x8] sm:$0xff]
  %v1472 = vld [vmem:[%s2 + $0x10] sm:$0xff]
  %v1473 = vld [vmem:[%s2 + $0x18] sm:$0xff]
  %v1474 = vld [vmem:[%s3] sm:$0xff]
  %v1475 = vld [vmem:[%s3 + $0x8] sm:$0xff]
  %v1476 = vld [vmem:[%s3 + $0x10] sm:$0xff]
  %v1477 = vld [vmem:[%s3 + $0x18] sm:$0xff]
  %v1478 = vld [vmem:[%s3 + $0x20] sm:$0xff]
  %v1479 = vld [vmem:[%s3 + $0x28] sm:$0xff]
  %v1480 = vld [vmem:[%s3 + $0x30] sm:$0xff]
  %v1481 = vld [vmem:[%s3 + $0x38] sm:$0xff]
  %v1482 = vld [vmem:[%s3 + $0x40] sm:$0xff]
  %v1483 = vld [vmem:[%s3 + $0x48] sm:$0xff]
  %v1484 = vld [vmem:[%s3 + $0x50] sm:$0xff]
  %v1485 = vld [vmem:[%s3 + $0x58] sm:$0xff]
  %v1487 = vsel %vm999, %v1470, 0
  %v1490 = vsel %vm999, %v1471, 0
  %v1493 = vsel %vm999, %v1472, 0
  %v1496 = vsel %vm999, %v1473, 0
  %1498 = vmatpush.msra.mxu0 0.0
  %1499 = vmatpush.msra.mxu0 0.0
  %1500 = vmatpush.msra.mxu0 0.0
  %1501 = vmatpush.msra.mxu0 0.0
  %1502 = vmatpush.msra.mxu0 0.0
  %1503 = vmatpush.msra.mxu0 0.0
  %1504 = vmatpush.msra.mxu0 0.0
  %1505 = vmatpush.msra.mxu0 0.0
  %1506 = vmatpush.msra.mxu0 0.0
  %1507 = vmatpush.msra.mxu0 0.0
  %1508 = vmatpush.msra.mxu0 0.0
  %1509 = vmatpush.msra.mxu0 0.0
  %1510 = vmatpush.msra.mxu0 0.0
  %1511 = vmatpush.msra.mxu0 0.0
  %1512 = vmatpush.msra.mxu0 %v1480
  %1513 = vmatpush.msra.mxu0 %v1474
  %1514 = vmatmul.f32.gmra.mxu0 %v1487
  %v1515 = vpop.f32.mrf.mxu0
  %v1516 = vadd.f32 0.0, %v1515
  %1517 = vmatmul.f32.gmra.mxu0 %v1490
  %v1518 = vpop.f32.mrf.mxu0
  %v1519 = vadd.f32 0.0, %v1518
  %1520 = vmatmul.f32.gmra.mxu0 %v1493
  %v1521 = vpop.f32.mrf.mxu0
  %v1522 = vadd.f32 0.0, %v1521
  %1523 = vmatmul.f32.gmra.mxu0 %v1496
  %v1524 = vpop.f32.mrf.mxu0
  %v1525 = vadd.f32 0.0, %v1524
  %1526 = vdwg.mxu0
  %1527 = vmatpush.msra.mxu0 0.0
  %1528 = vmatpush.msra.mxu0 0.0
  %1529 = vmatpush.msra.mxu0 0.0
  %1530 = vmatpush.msra.mxu0 0.0
  %1531 = vmatpush.msra.mxu0 0.0
  %1532 = vmatpush.msra.mxu0 0.0
  %1533 = vmatpush.msra.mxu0 0.0
  %1534 = vmatpush.msra.mxu0 0.0
  %1535 = vmatpush.msra.mxu0 0.0
  %1536 = vmatpush.msra.mxu0 0.0
  %1537 = vmatpush.msra.mxu0 0.0
  %1538 = vmatpush.msra.mxu0 0.0
  %1539 = vmatpush.msra.mxu0 0.0
  %1540 = vmatpush.msra.mxu0 0.0
  %1541 = vmatpush.msra.mxu0 %v1481
  %1542 = vmatpush.msra.mxu0 %v1475
  %1543 = vmatmul.f32.gmra.mxu0 %v1487
  %v1544 = vpop.f32.mrf.mxu0
  %v1545 = vadd.f32 0.0, %v1544
  %1546 = vmatmul.f32.gmra.mxu0 %v1490
  %v1547 = vpop.f32.mrf.mxu0
  %v1548 = vadd.f32 0.0, %v1547
  %1549 = vmatmul.f32.gmra.mxu0 %v1493
  %v1550 = vpop.f32.mrf.mxu0
  %v1551 = vadd.f32 0.0, %v1550
  %1552 = vmatmul.f32.gmra.mxu0 %v1496
  %v1553 = vpop.f32.mrf.mxu0
  %v1554 = vadd.f32 0.0, %v1553
  %1555 = vdwg.mxu0
  %1556 = vmatpush.msra.mxu0 0.0
  %1557 = vmatpush.msra.mxu0 0.0
  %1558 = vmatpush.msra.mxu0 0.0
  %1559 = vmatpush.msra.mxu0 0.0
  %1560 = vmatpush.msra.mxu0 0.0
  %1561 = vmatpush.msra.mxu0 0.0
  %1562 = vmatpush.msra.mxu0 0.0
  %1563 = vmatpush.msra.mxu0 0.0
  %1564 = vmatpush.msra.mxu0 0.0
  %1565 = vmatpush.msra.mxu0 0.0
  %1566 = vmatpush.msra.mxu0 0.0
  %1567 = vmatpush.msra.mxu0 0.0
  %1568 = vmatpush.msra.mxu0 0.0
  %1569 = vmatpush.msra.mxu0 0.0
  %1570 = vmatpush.msra.mxu0 %v1482
  %1571 = vmatpush.msra.mxu0 %v1476
  %1572 = vmatmul.f32.gmra.mxu0 %v1487
  %v1573 = vpop.f32.mrf.mxu0
  %v1574 = vadd.f32 0.0, %v1573
  %1575 = vmatmul.f32.gmra.mxu0 %v1490
  %v1576 = vpop.f32.mrf.mxu0
  %v1577 = vadd.f32 0.0, %v1576
  %1578 = vmatmul.f32.gmra.mxu0 %v1493
  %v1579 = vpop.f32.mrf.mxu0
  %v1580 = vadd.f32 0.0, %v1579
  %1581 = vmatmul.f32.gmra.mxu0 %v1496
  %v1582 = vpop.f32.mrf.mxu0
  %v1583 = vadd.f32 0.0, %v1582
  %1584 = vdwg.mxu0
  %1585 = vmatpush.msra.mxu0 0.0
  %1586 = vmatpush.msra.mxu0 0.0
  %1587 = vmatpush.msra.mxu0 0.0
  %1588 = vmatpush.msra.mxu0 0.0
  %1589 = vmatpush.msra.mxu0 0.0
  %1590 = vmatpush.msra.mxu0 0.0
  %1591 = vmatpush.msra.mxu0 0.0
  %1592 = vmatpush.msra.mxu0 0.0
  %1593 = vmatpush.msra.mxu0 0.0
  %1594 = vmatpush.msra.mxu0 0.0
  %1595 = vmatpush.msra.mxu0 0.0
  %1596 = vmatpush.msra.mxu0 0.0
  %1597 = vmatpush.msra.mxu0 0.0
  %1598 = vmatpush.msra.mxu0 0.0
  %1599 = vmatpush.msra.mxu0 %v1483
  %1600 = vmatpush.msra.mxu0 %v1477
  %1601 = vmatmul.f32.gmra.mxu0 %v1487
  %v1602 = vpop.f32.mrf.mxu0
  %v1603 = vadd.f32 0.0, %v1602
  %1604 = vmatmul.f32.gmra.mxu0 %v1490
  %v1605 = vpop.f32.mrf.mxu0
  %v1606 = vadd.f32 0.0, %v1605
  %1607 = vmatmul.f32.gmra.mxu0 %v1493
  %v1608 = vpop.f32.mrf.mxu0
  %v1609 = vadd.f32 0.0, %v1608
  %1610 = vmatmul.f32.gmra.mxu0 %v1496
  %v1611 = vpop.f32.mrf.mxu0
  %v1612 = vadd.f32 0.0, %v1611
  %1613 = vdwg.mxu0
  %1614 = vmatpush.msra.mxu0 0.0
  %1615 = vmatpush.msra.mxu0 0.0
  %1616 = vmatpush.msra.mxu0 0.0
  %1617 = vmatpush.msra.mxu0 0.0
  %1618 = vmatpush.msra.mxu0 0.0
  %1619 = vmatpush.msra.mxu0 0.0
  %1620 = vmatpush.msra.mxu0 0.0
  %1621 = vmatpush.msra.mxu0 0.0
  %1622 = vmatpush.msra.mxu0 0.0
  %1623 = vmatpush.msra.mxu0 0.0
  %1624 = vmatpush.msra.mxu0 0.0
  %1625 = vmatpush.msra.mxu0 0.0
  %1626 = vmatpush.msra.mxu0 0.0
  %1627 = vmatpush.msra.mxu0 0.0
  %1628 = vmatpush.msra.mxu0 %v1484
  %1629 = vmatpush.msra.mxu0 %v1478
  %1630 = vmatmul.f32.gmra.mxu0 %v1487
  %v1631 = vpop.f32.mrf.mxu0
  %v1632 = vadd.f32 0.0, %v1631
  %1633 = vmatmul.f32.gmra.mxu0 %v1490
  %v1634 = vpop.f32.mrf.mxu0
  %v1635 = vadd.f32 0.0, %v1634
  %1636 = vmatmul.f32.gmra.mxu0 %v1493
  %v1637 = vpop.f32.mrf.mxu0
  %v1638 = vadd.f32 0.0, %v1637
  %1639 = vmatmul.f32.gmra.mxu0 %v1496
  %v1640 = vpop.f32.mrf.mxu0
  %v1641 = vadd.f32 0.0, %v1640
  %1642 = vdwg.mxu0
  %1643 = vmatpush.msra.mxu0 0.0
  %1644 = vmatpush.msra.mxu0 0.0
  %1645 = vmatpush.msra.mxu0 0.0
  %1646 = vmatpush.msra.mxu0 0.0
  %1647 = vmatpush.msra.mxu0 0.0
  %1648 = vmatpush.msra.mxu0 0.0
  %1649 = vmatpush.msra.mxu0 0.0
  %1650 = vmatpush.msra.mxu0 0.0
  %1651 = vmatpush.msra.mxu0 0.0
  %1652 = vmatpush.msra.mxu0 0.0
  %1653 = vmatpush.msra.mxu0 0.0
  %1654 = vmatpush.msra.mxu0 0.0
  %1655 = vmatpush.msra.mxu0 0.0
  %1656 = vmatpush.msra.mxu0 0.0
  %1657 = vmatpush.msra.mxu0 %v1485
  %1658 = vmatpush.msra.mxu0 %v1479
  %1659 = vmatmul.f32.gmra.mxu0 %v1487
  %v1660 = vpop.f32.mrf.mxu0
  %v1661 = vadd.f32 0.0, %v1660
  %1662 = vmatmul.f32.gmra.mxu0 %v1490
  %v1663 = vpop.f32.mrf.mxu0
  %v1664 = vadd.f32 0.0, %v1663
  %1665 = vmatmul.f32.gmra.mxu0 %v1493
  %v1666 = vpop.f32.mrf.mxu0
  %v1667 = vadd.f32 0.0, %v1666
  %1668 = vmatmul.f32.gmra.mxu0 %v1496
  %v1669 = vpop.f32.mrf.mxu0
  %v1670 = vadd.f32 0.0, %v1669
  %1671 = vdwg.mxu0
  %v1672 = vld [vmem:[%s4] sm:$0x77]
  %v1673 = vld [vmem:[%s4 + $0x8] sm:$0x77]
  %v1674 = vld [vmem:[%s4 + $0x10] sm:$0x77]
  %v1681 = vrot.slane %v1051, 4
  %v1682 = vrot.slane %v1103, 4
  %v1683 = vrot.slane %v1155, 4
  %vm1684 = vcmask 1043456
  %v1685 = vsel %vm1684, %v1025, %v1681
  %v1686 = vsel %vm1684, %v1077, %v1682
  %v1687 = vsel %vm1684, %v1129, %v1683
  %v1691 = vadd.f32 %v1672, %v1685
  %v1692 = vadd.f32 %v1673, %v1686
  %v1693 = vadd.f32 %v1674, %v1687
  %v1700 = vrot.slane %v1207, 4
  %v1701 = vrot.slane %v1259, 4
  %v1702 = vrot.slane %v1311, 4
  %v1703 = vsel %vm1684, %v1181, %v1700
  %v1704 = vsel %vm1684, %v1233, %v1701
  %v1705 = vsel %vm1684, %v1285, %v1702
  %v1706 = vrot.slane %v1703, 7
  %v1707 = vrot.slane %v1704, 7
  %v1708 = vrot.slane %v1705, 7
  %v1712 = vadd.f32 %v1672, %v1706
  %v1713 = vadd.f32 %v1673, %v1707
  %v1714 = vadd.f32 %v1674, %v1708
  %v1721 = vrot.slane %v1363, 4
  %v1722 = vrot.slane %v1415, 4
  %v1723 = vrot.slane %v1467, 4
  %v1724 = vsel %vm1684, %v1337, %v1721
  %v1725 = vsel %vm1684, %v1389, %v1722
  %v1726 = vsel %vm1684, %v1441, %v1723
  %v1727 = vrot.slane %v1724, 6
  %v1728 = vrot.slane %v1725, 6
  %v1729 = vrot.slane %v1726, 6
  %v1733 = vadd.f32 %v1672, %v1727
  %v1734 = vadd.f32 %v1673, %v1728
  %v1735 = vadd.f32 %v1674, %v1729
  %v1739 = vperm.slane %v1691, 0
  %v1740 = vperm.slane %v1691, 4
  %v1741 = vperm.slane %v1692, 0
  %v1742 = vperm.slane %v1692, 4
  %v1743 = vperm.slane %v1693, 0
  %v1744 = vperm.slane %v1693, 4
  %v1751 = vperm.slane %v1739, 0
  %v1752 = vperm.slane %v1740, 0
  %v1753 = vperm.slane %v1741, 0
  %v1754 = vperm.slane %v1742, 0
  %v1755 = vperm.slane %v1743, 0
  %v1756 = vperm.slane %v1744, 0
  %v1757 = vmul.f32 %v1516, %v1751
  %v1758 = vmul.f32 %v1545, %v1752
  %v1759 = vmul.f32 %v1574, %v1753
  %v1760 = vmul.f32 %v1603, %v1754
  %v1761 = vmul.f32 %v1632, %v1755
  %v1762 = vmul.f32 %v1661, %v1756
  %v1766 = vperm.slane %v1712, 1
  %v1767 = vperm.slane %v1712, 5
  %v1768 = vperm.slane %v1713, 1
  %v1769 = vperm.slane %v1713, 5
  %v1770 = vperm.slane %v1714, 1
  %v1771 = vperm.slane %v1714, 5
  %v1778 = vperm.slane %v1766, 1
  %v1779 = vperm.slane %v1767, 1
  %v1780 = vperm.slane %v1768, 1
  %v1781 = vperm.slane %v1769, 1
  %v1782 = vperm.slane %v1770, 1
  %v1783 = vperm.slane %v1771, 1
  %v1784 = vmul.f32 %v1516, %v1778
  %v1785 = vmul.f32 %v1545, %v1779
  %v1786 = vmul.f32 %v1574, %v1780
  %v1787 = vmul.f32 %v1603, %v1781
  %v1788 = vmul.f32 %v1632, %v1782
  %v1789 = vmul.f32 %v1661, %v1783
  %v1796 = vrot.slane %v1784, 4
  %v1797 = vrot.slane %v1785, 4
  %v1798 = vrot.slane %v1786, 4
  %v1799 = vrot.slane %v1787, 4
  %v1800 = vrot.slane %v1788, 4
  %v1801 = vrot.slane %v1789, 4
  %v1808 = vadd.f32 %v1757, %v1796
  %v1809 = vadd.f32 %v1758, %v1797
  %v1810 = vadd.f32 %v1759, %v1798
  %v1811 = vadd.f32 %v1760, %v1799
  %v1812 = vadd.f32 %v1761, %v1800
  %v1813 = vadd.f32 %v1762, %v1801
  %v1817 = vperm.slane %v1733, 2
  %v1818 = vperm.slane %v1733, 6
  %v1819 = vperm.slane %v1734, 2
  %v1820 = vperm.slane %v1734, 6
  %v1821 = vperm.slane %v1735, 2
  %v1822 = vperm.slane %v1735, 6
  %v1829 = vperm.slane %v1817, 2
  %v1830 = vperm.slane %v1818, 2
  %v1831 = vperm.slane %v1819, 2
  %v1832 = vperm.slane %v1820, 2
  %v1833 = vperm.slane %v1821, 2
  %v1834 = vperm.slane %v1822, 2
  %v1835 = vmul.f32 %v1519, %v1829
  %v1836 = vmul.f32 %v1548, %v1830
  %v1837 = vmul.f32 %v1577, %v1831
  %v1838 = vmul.f32 %v1606, %v1832
  %v1839 = vmul.f32 %v1635, %v1833
  %v1840 = vmul.f32 %v1664, %v1834
  %v1841 = vadd.f32 %v1808, %v1835
  %v1842 = vadd.f32 %v1809, %v1836
  %v1843 = vadd.f32 %v1810, %v1837
  %v1844 = vadd.f32 %v1811, %v1838
  %v1845 = vadd.f32 %v1812, %v1839
  %v1846 = vadd.f32 %v1813, %v1840
  %v1853 = vrot.slane %v1519, 4
  %v1854 = vrot.slane %v1548, 4
  %v1855 = vrot.slane %v1577, 4
  %v1856 = vrot.slane %v1606, 4
  %v1857 = vrot.slane %v1635, 4
  %v1858 = vrot.slane %v1664, 4
  %v1865 = vadd.f32 %v1841, %v1853
  %v1866 = vadd.f32 %v1842, %v1854
  %v1867 = vadd.f32 %v1843, %v1855
  %v1868 = vadd.f32 %v1844, %v1856
  %v1869 = vadd.f32 %v1845, %v1857
  %v1870 = vadd.f32 %v1846, %v1858
  %1871 = vst [vmem:[%s5] sm:$0x7] %v1865
  %1872 = vst [vmem:[%s5 + $0x8] sm:$0x7] %v1866
  %1873 = vst [vmem:[%s5 + $0x10] sm:$0x7] %v1867
  %1874 = vst [vmem:[%s5 + $0x18] sm:$0x7] %v1868
  %1875 = vst [vmem:[%s5 + $0x20] sm:$0x7] %v1869
  %1876 = vst [vmem:[%s5 + $0x28] sm:$0x7] %v1870
  %v1877 = vrot.slane %v1685, 5
  %v1878 = vrot.slane %v1877, 4
  %v1879 = vrot.slane %v1686, 5
  %v1880 = vrot.slane %v1879, 4
  %v1881 = vrot.slane %v1687, 5
  %v1882 = vrot.slane %v1881, 4
  %v1886 = vadd.f32 %v1672, %v1878
  %v1887 = vadd.f32 %v1673, %v1880
  %v1888 = vadd.f32 %v1674, %v1882
  %v1892 = vadd.f32 %v1672, %v1703
  %v1893 = vadd.f32 %v1673, %v1704
  %v1894 = vadd.f32 %v1674, %v1705
  %v1895 = vrot.slane %v1724, 7
  %v1896 = vrot.slane %v1725, 7
  %v1897 = vrot.slane %v1726, 7
  %v1901 = vadd.f32 %v1672, %v1895
  %v1902 = vadd.f32 %v1673, %v1896
  %v1903 = vadd.f32 %v1674, %v1897
  %v1907 = vperm.slane %v1886, 0
  %v1908 = vperm.slane %v1886, 4
  %v1909 = vperm.slane %v1887, 0
  %v1910 = vperm.slane %v1887, 4
  %v1911 = vperm.slane %v1888, 0
  %v1912 = vperm.slane %v1888, 4
  %v1919 = vperm.slane %v1907, 0
  %v1920 = vperm.slane %v1908, 0
  %v1921 = vperm.slane %v1909, 0
  %v1922 = vperm.slane %v1910, 0
  %v1923 = vperm.slane %v1911, 0
  %v1924 = vperm.slane %v1912, 0
  %v1925 = vmul.f32 %v1522, %v1919
  %v1926 = vmul.f32 %v1551, %v1920
  %v1927 = vmul.f32 %v1580, %v1921
  %v1928 = vmul.f32 %v1609, %v1922
  %v1929 = vmul.f32 %v1638, %v1923
  %v1930 = vmul.f32 %v1667, %v1924
  %v1934 = vperm.slane %v1892, 1
  %v1935 = vperm.slane %v1892, 5
  %v1936 = vperm.slane %v1893, 1
  %v1937 = vperm.slane %v1893, 5
  %v1938 = vperm.slane %v1894, 1
  %v1939 = vperm.slane %v1894, 5
  %v1946 = vperm.slane %v1934, 1
  %v1947 = vperm.slane %v1935, 1
  %v1948 = vperm.slane %v1936, 1
  %v1949 = vperm.slane %v1937, 1
  %v1950 = vperm.slane %v1938, 1
  %v1951 = vperm.slane %v1939, 1
  %v1952 = vmul.f32 %v1522, %v1946
  %v1953 = vmul.f32 %v1551, %v1947
  %v1954 = vmul.f32 %v1580, %v1948
  %v1955 = vmul.f32 %v1609, %v1949
  %v1956 = vmul.f32 %v1638, %v1950
  %v1957 = vmul.f32 %v1667, %v1951
  %v1964 = vrot.slane %v1952, 4
  %v1965 = vrot.slane %v1953, 4
  %v1966 = vrot.slane %v1954, 4
  %v1967 = vrot.slane %v1955, 4
  %v1968 = vrot.slane %v1956, 4
  %v1969 = vrot.slane %v1957, 4
  %v1976 = vadd.f32 %v1925, %v1964
  %v1977 = vadd.f32 %v1926, %v1965
  %v1978 = vadd.f32 %v1927, %v1966
  %v1979 = vadd.f32 %v1928, %v1967
  %v1980 = vadd.f32 %v1929, %v1968
  %v1981 = vadd.f32 %v1930, %v1969
  %v1985 = vperm.slane %v1901, 2
  %v1986 = vperm.slane %v1901, 6
  %v1987 = vperm.slane %v1902, 2
  %v1988 = vperm.slane %v1902, 6
  %v1989 = vperm.slane %v1903, 2
  %v1990 = vperm.slane %v1903, 6
  %v1997 = vperm.slane %v1985, 2
  %v1998 = vperm.slane %v1986, 2
  %v1999 = vperm.slane %v1987, 2
  %v2000 = vperm.slane %v1988, 2
  %v2001 = vperm.slane %v1989, 2
  %v2002 = vperm.slane %v1990, 2
  %v2003 = vmul.f32 %v1525, %v1997
  %v2004 = vmul.f32 %v1554, %v1998
  %v2005 = vmul.f32 %v1583, %v1999
  %v2006 = vmul.f32 %v1612, %v2000
  %v2007 = vmul.f32 %v1641, %v2001
  %v2008 = vmul.f32 %v1670, %v2002
  %v2009 = vadd.f32 %v1976, %v2003
  %v2010 = vadd.f32 %v1977, %v2004
  %v2011 = vadd.f32 %v1978, %v2005
  %v2012 = vadd.f32 %v1979, %v2006
  %v2013 = vadd.f32 %v1980, %v2007
  %v2014 = vadd.f32 %v1981, %v2008
  %v2021 = vrot.slane %v1525, 4
  %v2022 = vrot.slane %v1554, 4
  %v2023 = vrot.slane %v1583, 4
  %v2024 = vrot.slane %v1612, 4
  %v2025 = vrot.slane %v1641, 4
  %v2026 = vrot.slane %v1670, 4
  %v2033 = vadd.f32 %v2009, %v2021
  %v2034 = vadd.f32 %v2010, %v2022
  %v2035 = vadd.f32 %v2011, %v2023
  %v2036 = vadd.f32 %v2012, %v2024
  %v2037 = vadd.f32 %v2013, %v2025
  %v2038 = vadd.f32 %v2014, %v2026
  %v2045 = vrot.slane %v2033, 5
  %v2046 = vrot.slane %v2034, 5
  %v2047 = vrot.slane %v2035, 5
  %v2048 = vrot.slane %v2036, 5
  %v2049 = vrot.slane %v2037, 5
  %v2050 = vrot.slane %v2038, 5
  %2057 = vst [vmem:[%s5] sm:$0x38] %v2045
  %2058 = vst [vmem:[%s5 + $0x8] sm:$0x38] %v2046
  %2059 = vst [vmem:[%s5 + $0x10] sm:$0x38] %v2047
  %2060 = vst [vmem:[%s5 + $0x18] sm:$0x38] %v2048
  %2061 = vst [vmem:[%s5 + $0x20] sm:$0x38] %v2049
  %2062 = vst [vmem:[%s5 + $0x28] sm:$0x38] %v2050
  // Predicated region
  $region22: #{_forward_layer.1} parent=0 // pred_check
    _
  $region23: #{_forward_layer.1} parent=0 // pred_check_branch
    %2064 = sbr.rel (0) target = $region25
  $region24: #{_forward_layer.1} parent=0 // pred_region
    _
  $region25: #{_forward_layer.1} parent=0 // pred_fallthru
    _
  // Predicated region
  $region26: #{_forward_layer.1} parent=0 // pred_check
    _
  $region27: #{_forward_layer.1} parent=0 // pred_check_branch
    %2066 = sbr.rel (0) target = $region29
  $region28: #{_forward_layer.1} parent=0 // pred_region
    _
  $region29: #{_forward_layer.1} parent=0 // pred_fallthru
    _

</llo_original>
